<compile_context>
chip_gen: v7x
topology: tpu7x:2x2x1
jax: 0.10.0
libtpu: 0.0.40
codegen_flags: <defaults>
</compile_context>

<pallas_src>
import jax
import jax.numpy as jnp
from jax.experimental import pallas as pl
from jax.experimental.pallas import tpu as pltpu


# ----------------------------------------------------------------------------
# helpers
# ----------------------------------------------------------------------------
def _leaky_relu(x, slope=0.02):
    # max-form: 2 VPU ops/vreg instead of where's 3
    return jnp.maximum(x, slope * x)


def _round_up(x, m):
    return (x + m - 1) // m * m


def _cdiv(a, b):
    return (a + b - 1) // b


def _choose_tile_n(Np, B, tile_n):
    # 128-multiple clamp, cap 16384 (keeps per-step footprint < v5e's 16 MiB
    # default scoped VMEM), never larger than needed.
    tile_n = max(128, min(int(tile_n), 16384))
    tile_n = _round_up(tile_n, 128)
    tile_n = min(tile_n, _round_up(Np, 128))
    # v7x has 2 TensorCores: make sure the (B, tiles) grid has >= 2 steps.
    if B * _cdiv(Np, tile_n) < 2:
        tile_n = max(128, _round_up(_cdiv(Np, 2), 128))
    return tile_n


# ----------------------------------------------------------------------------
# Fused encoder kernel: 5 dense layers (conv layers folded to dense matrices)
# plus the generator's per-batch effective layer-1 bias b1_eff = b1 + z @ W1z.
# ----------------------------------------------------------------------------
def _encoder_kernel(x_ref, w0_ref, b0_ref, w1_ref, b1_ref, w2_ref, b2_ref,
                    w3_ref, b3_ref, w4_ref, b4_ref, w1z_ref, gb1_ref,
                    z_ref, b1e_ref):
    h = x_ref[...]
    for w_ref, b_ref in ((w0_ref, b0_ref), (w1_ref, b1_ref),
                         (w2_ref, b2_ref), (w3_ref, b3_ref)):
        h = _leaky_relu(
            jnp.dot(h, w_ref[...], preferred_element_type=jnp.float32)
            + b_ref[...])
    z = jax.nn.sigmoid(
        jnp.dot(h, w4_ref[...], preferred_element_type=jnp.float32)
        + b4_ref[...])
    z_ref[...] = z
    # fold z into the generator's layer-1 bias once per batch
    b1e_ref[...] = gb1_ref[...] + jnp.dot(
        z, w1z_ref[...], preferred_element_type=jnp.float32)


def img_encoder_forward(inputs, dense_params, w1z, gb1):
    """inputs: (B, 1, H, W) NCHW -> (z: (B, z_dim), b1_eff: (B, gf))."""
    B = inputs.shape[0]
    x = inputs.reshape(B, -1)  # flattened NCHW feature vector
    flat = [x]
    for w, b in dense_params:
        flat += [w, b]
    flat += [w1z, gb1]
    z_dim = dense_params[-1][0].shape[1]
    gf = w1z.shape[1]

    return pl.pallas_call(
        _encoder_kernel,
        out_shape=(jax.ShapeDtypeStruct((B, z_dim), jnp.float32),
                   jax.ShapeDtypeStruct((B, gf), jnp.float32)),
        grid=(1,),
        in_specs=[pl.BlockSpec(a.shape, lambda i: (0, 0)) for a in flat],
        out_specs=(pl.BlockSpec((B, z_dim), lambda i: (0, 0)),
                   pl.BlockSpec((B, gf), lambda i: (0, 0))),
    )(*flat)


# ----------------------------------------------------------------------------
# conv layer -> equivalent dense matrix on flattened NCHW features
# (weight preprocessing, done once; uses linearity: conv(x) = sum x_k conv(e_k))
# ----------------------------------------------------------------------------
def _conv_to_dense(w, b, hi, wi, stride, pad):
    cout, cin, kh, kw = w.shape
    n_in = cin * hi * wi
    eye = jnp.eye(n_in, dtype=jnp.float32).reshape(n_in, cin, hi, wi)
    cols = jax.lax.conv_general_dilated(
        eye, w, (stride, stride), [(pad, pad), (pad, pad)],
        dimension_numbers=("NCHW", "OIHW", "NCHW"))      # (n_in, cout, ho, wo)
    ho, wo = cols.shape[2], cols.shape[3]
    w_dense = cols.reshape(n_in, cout * ho * wo)
    b_dense = jnp.broadcast_to(b[:, None, None],
                               (cout, ho, wo)).reshape(1, cout * ho * wo)
    return w_dense, b_dense, ho, wo


def prepare_encoder_dense(eparams, in_hw=16):
    strides = (2, 2, 2, 2, 1)
    pads = (1, 1, 1, 1, 0)
    h = w = in_hw
    dense = []
    for (wt, bt), s, p in zip(eparams, strides, pads):
        wd, bd, h, w = _conv_to_dense(wt, bt, h, w, s, p)
        dense.append((wd, bd))
    return tuple(dense)


# ----------------------------------------------------------------------------
# One-time generator weight preprocessing (transposes + bf16 casts hoisted out
# of the per-call path).
# ----------------------------------------------------------------------------
def prepare_generator_params(gparams, point_dim):
    w1, b1, w2, b2, w3, b3 = gparams
    return dict(
        w1xyz_t=jnp.asarray(w1[:point_dim, :].T, jnp.float32),  # (gf, pd) f32
        w1z=jnp.asarray(w1[point_dim:, :], jnp.float32),        # (zd, gf) f32
        b1=jnp.asarray(b1, jnp.float32),                        # (1, gf)  f32
        w2t=jnp.asarray(w2.T, jnp.bfloat16),                    # (gf, gf)
        w3t=jnp.asarray(w3.T, jnp.bfloat16),                    # (gs, gf)
        b2t=jnp.asarray(b2.T, jnp.float32),                     # (gf, 1)
        b3t=jnp.asarray(b3.T, jnp.float32),                     # (gs, 1)
    )


def prepare_point_coord(point_coord, tile_n=8192):
    """(B, Np, pd) -> lane-dense (B, pd+1, Np_p) with a ones row (bias fold).
    Can be hoisted outside the per-call jit when the sample grid is fixed."""
    B, Np, pd = point_coord.shape
    tile_n = _choose_tile_n(Np, B, tile_n)
    Np_p = _round_up(Np, tile_n)
    pc_t = jnp.swapaxes(point_coord, 1, 2)                   # (B, pd, Np)
    ones = jnp.ones((B, 1, Np), point_coord.dtype)
    pc_aug = jnp.concatenate([pc_t, ones], axis=1)           # (B, pd+1, Np)
    if Np_p != Np:
        pc_aug = jnp.pad(pc_aug, ((0, 0), (0, 0), (0, Np_p - Np)))
    return pc_aug.astype(jnp.float32), Np, tile_n


# ----------------------------------------------------------------------------
# Fused generator kernel (transposed / lane-dense orientation)
#   points:  (pd+1, tile_n) f32 (ones row for bias)   per-batch LHS: (gf, pd+1)
#   outputs: part (gs, tile_n) f32, net (1, tile_n) f32  -> lane-dense stores
# ----------------------------------------------------------------------------
def _generator_kernel(pc_ref, w1_ref, w2_ref, w3_ref, b2_ref, b3_ref,
                      part_ref, net_ref):
    x = pc_ref[0]                                            # (pd+1, tile_n) f32
    # Layer 1 in f32 (K=4 -> MXU cost negligible; avoids bf16 coord aliasing).
    # Bias (incl. folded z contribution) rides the MXU via the ones row.
    h1f = jnp.dot(w1_ref[0], x, preferred_element_type=jnp.float32)
    h1 = _leaky_relu(h1f.astype(jnp.bfloat16))               # (gf, tile_n) bf16
    h2f = (jnp.dot(w2_ref[...], h1, preferred_element_type=jnp.float32)
           + b2_ref[...])
    h2 = _leaky_relu(h2f.astype(jnp.bfloat16))               # (gf, tile_n) bf16
    l3 = jax.nn.sigmoid(
        jnp.dot(w3_ref[...], h2, preferred_element_type=jnp.float32)
        + b3_ref[...])                                       # (gs, tile_n) f32
    part_ref[0] = l3
    # net_ = max over the gs branches: cheap sublane reduce of the resident tile
    net_ref[0] = jnp.max(l3, axis=0, keepdims=True)          # (1, tile_n)


def generator_forward(point_coord, b1_eff, prep, tile_n=8192, return_part=True):
    """point_coord: (B, Np, pd), b1_eff: (B, gf) -> part (B,Np,gs), net (B,Np,1)."""
    pc_aug, Np, tile_n = prepare_point_coord(point_coord, tile_n)
    B, pdp1, Np_p = pc_aug.shape
    gf = prep["w2t"].shape[0]
    gs = prep["w3t"].shape[0]

    # Per-batch layer-1 matrix [W1[:pd]^T | b1_eff[b]]  (tiny, B*gf*(pd+1) f32).
    w1aug = jnp.concatenate(
        [jnp.broadcast_to(prep["w1xyz_t"][None], (B, gf, pdp1 - 1)),
         b1_eff[:, :, None].astype(jnp.float32)], axis=2)    # (B, gf, pd+1)

    part_t, net_t = pl.pallas_call(
        _generator_kernel,
        out_shape=(jax.ShapeDtypeStruct((B, gs, Np_p), jnp.float32),
                   jax.ShapeDtypeStruct((B, 1, Np_p), jnp.float32)),
        grid=(B, Np_p // tile_n),
        in_specs=[
            pl.BlockSpec((1, pdp1, tile_n), lambda b, j: (b, 0, j)),  # points
            pl.BlockSpec((1, gf, pdp1), lambda b, j: (b, 0, 0)),      # [W1t|b1e]
            pl.BlockSpec((gf, gf), lambda b, j: (0, 0)),              # W2^T bf16
            pl.BlockSpec((gs, gf), lambda b, j: (0, 0)),              # W3^T bf16
            pl.BlockSpec((gf, 1), lambda b, j: (0, 0)),               # b2^T
            pl.BlockSpec((gs, 1), lambda b, j: (0, 0)),               # b3^T
        ],
        out_specs=(pl.BlockSpec((1, gs, tile_n), lambda b, j: (b, 0, j)),
                   pl.BlockSpec((1, 1, tile_n), lambda b, j: (b, 0, j))),
        compiler_params=pltpu.CompilerParams(
            dimension_semantics=("parallel", "parallel")),
    )(pc_aug, w1aug, prep["w2t"], prep["w3t"], prep["b2t"], prep["b3t"])

    # padded tail columns are garbage -> sliced off before any use
    net_ = jnp.swapaxes(net_t[:, :, :Np], 1, 2)              # (B, Np, 1) cheap
    part_ = None
    if return_part:
        part_ = jnp.swapaxes(part_t[:, :, :Np], 1, 2)        # (B, Np, gs)
    return part_, net_


# ----------------------------------------------------------------------------
# IMSVR_Network.forward (same branch semantics as the PyTorch module)
# ----------------------------------------------------------------------------
def imsvr_forward(params, inputs, z_vector, point_coord, is_training=False,
                  tile_n=8192, return_part=True):
    prep = params["generator_prep"]
    part_, net_ = None, None
    if is_training:
        z_vector, _ = img_encoder_forward(inputs, params["encoder_dense"],
                                          prep["w1z"], prep["b1"])
    else:
        b1_eff = None
        if inputs is not None:
            z_vector, b1_eff = img_encoder_forward(
                inputs, params["encoder_dense"], prep["w1z"], prep["b1"])
        if z_vector is not None and point_coord is not None:
            if b1_eff is None:  # z given directly -> tiny wrapper-side fold
                b1_eff = prep["b1"] + z_vector @ prep["w1z"]
            part_, net_ = generator_forward(point_coord, b1_eff, prep,
                                            tile_n=tile_n,
                                            return_part=return_part)
    return z_vector, part_, net_


# ----------------------------------------------------------------------------
# Deterministic synthetic parameters
# ----------------------------------------------------------------------------
def init_params(key, img_ef_dim, z_dim, point_dim, gf_dim, gf_split):
    ks = jax.random.split(key, 16)
    it = iter(ks)

    def conv_p(cin, cout, k):
        w = 0.05 * jax.random.normal(next(it), (cout, cin, k, k), jnp.float32)
        b = 0.05 * jax.random.normal(next(it), (cout,), jnp.float32)
        return w, b

    def lin_p(cin, cout):
        w = 0.05 * jax.random.normal(next(it), (cin, cout), jnp.float32)
        b = 0.05 * jax.random.normal(next(it), (1, cout), jnp.float32)
        return w, b

    encoder = (
        conv_p(1, img_ef_dim, 4),
        conv_p(img_ef_dim, img_ef_dim * 2, 4),
        conv_p(img_ef_dim * 2, img_ef_dim * 4, 4),
        conv_p(img_ef_dim * 4, img_ef_dim * 8, 4),
        conv_p(img_ef_dim * 8, z_dim, 1),
    )
    (w1, b1) = lin_p(z_dim + point_dim, gf_dim)
    (w2, b2) = lin_p(gf_dim, gf_dim)
    (w3, b3) = lin_p(gf_dim, gf_split)
    generator = (w1, b1, w2, b2, w3, b3)
    return {"encoder": encoder, "generator": generator}


# ----------------------------------------------------------------------------
# Pure-JAX reference (correctness sanity check)
# ----------------------------------------------------------------------------
def _ref_conv(x, w, b, stride, pad):
    y = jax.lax.conv_general_dilated(
        x, w, (stride, stride), [(pad, pad), (pad, pad)],
        dimension_numbers=("NCHW", "OIHW", "NCHW"))
    return y + b.reshape(1, -1, 1, 1)


def ref_forward(params, inputs, point_coord):
    (w0, b0), (w1, b1), (w2, b2), (w3, b3), (w4, b4) = params["encoder"]
    x = _leaky_relu(_ref_conv(inputs, w0, b0, 2, 1))
    x = _leaky_relu(_ref_conv(x, w1, b1, 2, 1))
    x = _leaky_relu(_ref_conv(x, w2, b2, 2, 1))
    x = _leaky_relu(_ref_conv(x, w3, b3, 2, 1))
    x = jax.nn.sigmoid(_ref_conv(x, w4, b4, 1, 0))
    z = x.reshape(x.shape[0], -1)

    gw1, gb1, gw2, gb2, gw3, gb3 = params["generator"]
    B, Np, _ = point_coord.shape
    zs = jnp.broadcast_to(z[:, None, :], (B, Np, z.shape[1]))
    pz = jnp.concatenate([point_coord, zs], axis=2)
    h1 = _leaky_relu(pz @ gw1 + gb1)
    h2 = _leaky_relu(h1 @ gw2 + gb2)
    l3 = jax.nn.sigmoid(h2 @ gw3 + gb3)
    return z, l3, jnp.max(l3, axis=2, keepdims=True)


# ----------------------------------------------------------------------------
if __name__ == "__main__":
    cfg = dict(img_ef_dim=4, z_dim=32, point_dim=3, gf_dim=32, gf_split=8)

    key = jax.random.PRNGKey(0)
    kp, ki, kc = jax.random.split(key, 3)
    params = init_params(kp, **cfg)
    # One-time weight preprocessing (conv->dense fold, generator transposes).
    params["encoder_dense"] = prepare_encoder_dense(params["encoder"], in_hw=16)
    params["generator_prep"] = prepare_generator_params(params["generator"],
                                                        cfg["point_dim"])

    B, Np = 2, 64
    inputs = jax.random.uniform(ki, (B, 1, 16, 16), jnp.float32)
    point_coord = jax.random.uniform(kc, (B, Np, cfg["point_dim"]),
                                     jnp.float32) - 0.5

    # Inference path of IMSVR_Network.forward: encoder -> generator.
    fwd = jax.jit(lambda p, img, pc: imsvr_forward(p, img, None, pc,
                                                   is_training=False))
    z, part_, net_ = fwd(params, inputs, point_coord)
    jax.block_until_ready((z, part_, net_))

    # Sanity check against a pure-JAX f32 reference.
    z_r, part_r, net_r = ref_forward(params, inputs, point_coord)
    assert z.shape == (B, cfg["z_dim"])
    assert part_.shape == (B, Np, cfg["gf_split"])
    assert net_.shape == (B, Np, 1)
    assert jnp.allclose(z, z_r, atol=1e-3, rtol=1e-3)
    # generator layers 2/3 use bf16 MXU operands (f32 accumulation) -> looser tol
    assert jnp.allclose(part_, part_r, atol=5e-3, rtol=5e-3)
    assert jnp.allclose(net_, net_r, atol=5e-3, rtol=5e-3)

    print("KERNEL_OK")
</pallas_src>

<mosaic_0001>
module attributes {stable_mosaic.version = 11 : i64} {
  func.func @_encoder_kernel(%arg0: i32, %arg1: memref<2x256xf32, #tpu.memory_space<vmem>>, %arg2: memref<256x256xf32, #tpu.memory_space<vmem>>, %arg3: memref<1x256xf32, #tpu.memory_space<vmem>>, %arg4: memref<256x128xf32, #tpu.memory_space<vmem>>, %arg5: memref<1x128xf32, #tpu.memory_space<vmem>>, %arg6: memref<128x64xf32, #tpu.memory_space<vmem>>, %arg7: memref<1x64xf32, #tpu.memory_space<vmem>>, %arg8: memref<64x32xf32, #tpu.memory_space<vmem>>, %arg9: memref<1x32xf32, #tpu.memory_space<vmem>>, %arg10: memref<32x32xf32, #tpu.memory_space<vmem>>, %arg11: memref<1x32xf32, #tpu.memory_space<vmem>>, %arg12: memref<32x32xf32, #tpu.memory_space<vmem>>, %arg13: memref<1x32xf32, #tpu.memory_space<vmem>>, %arg14: memref<2x32xf32, #tpu.memory_space<vmem>>, %arg15: memref<2x32xf32, #tpu.memory_space<vmem>>) attributes {dimension_semantics = [#tpu.dimension_semantics<arbitrary>], iteration_bounds = array<i64: 1>, scalar_prefetch = 0 : i64, scratch_operands = 0 : i64, tpu.core_type = #tpu.core_type<tc>, window_params = [{pipeline_mode = #tpu.pipeline_mode<synchronous>, transform_indices = @transform_0, window_bounds = array<i64: 2, 256>}, {pipeline_mode = #tpu.pipeline_mode<synchronous>, transform_indices = @transform_1, window_bounds = array<i64: 256, 256>}, {pipeline_mode = #tpu.pipeline_mode<synchronous>, transform_indices = @transform_2, window_bounds = array<i64: 1, 256>}, {pipeline_mode = #tpu.pipeline_mode<synchronous>, transform_indices = @transform_3, window_bounds = array<i64: 256, 128>}, {pipeline_mode = #tpu.pipeline_mode<synchronous>, transform_indices = @transform_4, window_bounds = array<i64: 1, 128>}, {pipeline_mode = #tpu.pipeline_mode<synchronous>, transform_indices = @transform_5, window_bounds = array<i64: 128, 64>}, {pipeline_mode = #tpu.pipeline_mode<synchronous>, transform_indices = @transform_6, window_bounds = array<i64: 1, 64>}, {pipeline_mode = #tpu.pipeline_mode<synchronous>, transform_indices = @transform_7, window_bounds = array<i64: 64, 32>}, {pipeline_mode = #tpu.pipeline_mode<synchronous>, transform_indices = @transform_8, window_bounds = array<i64: 1, 32>}, {pipeline_mode = #tpu.pipeline_mode<synchronous>, transform_indices = @transform_9, window_bounds = array<i64: 32, 32>}, {pipeline_mode = #tpu.pipeline_mode<synchronous>, transform_indices = @transform_10, window_bounds = array<i64: 1, 32>}, {pipeline_mode = #tpu.pipeline_mode<synchronous>, transform_indices = @transform_11, window_bounds = array<i64: 32, 32>}, {pipeline_mode = #tpu.pipeline_mode<synchronous>, transform_indices = @transform_12, window_bounds = array<i64: 1, 32>}, {pipeline_mode = #tpu.pipeline_mode<synchronous>, transform_indices = @transform_13, window_bounds = array<i64: 2, 32>}, {pipeline_mode = #tpu.pipeline_mode<synchronous>, transform_indices = @transform_14, window_bounds = array<i64: 2, 32>}]} {
    %c0 = arith.constant 0 : index
    %c0_0 = arith.constant 0 : index
    %0 = vector.load %arg1[%c0, %c0_0] : memref<2x256xf32, #tpu.memory_space<vmem>>, vector<2x256xf32>
    %c0_1 = arith.constant 0 : index
    %c0_2 = arith.constant 0 : index
    %1 = vector.load %arg2[%c0_1, %c0_2] : memref<256x256xf32, #tpu.memory_space<vmem>>, vector<256x256xf32>
    %cst = arith.constant dense<0.000000e+00> : vector<2x256xf32>
    %2 = tpu.matmul %0, %1, %cst {dimension_numbers = #tpu.dot_dimension_numbers<[1], [0], [0], [1], [0, 0, 1, 1], [], []>} : vector<2x256xf32>, vector<256x256xf32>, vector<2x256xf32> -> vector<2x256xf32>
    %c0_3 = arith.constant 0 : index
    %c0_4 = arith.constant 0 : index
    %3 = vector.load %arg3[%c0_3, %c0_4] : memref<1x256xf32, #tpu.memory_space<vmem>>, vector<1x256xf32>
    %4 = vector.broadcast %3 : vector<1x256xf32> to vector<2x256xf32>
    %5 = arith.addf %2, %4 : vector<2x256xf32>
    %cst_5 = arith.constant 2.000000e-02 : f32
    %6 = vector.broadcast %cst_5 : f32 to vector<2x256xf32>
    %7 = arith.mulf %6, %5 : vector<2x256xf32>
    %8 = arith.maximumf %5, %7 : vector<2x256xf32>
    %c0_6 = arith.constant 0 : index
    %c0_7 = arith.constant 0 : index
    %9 = vector.load %arg4[%c0_6, %c0_7] : memref<256x128xf32, #tpu.memory_space<vmem>>, vector<256x128xf32>
    %cst_8 = arith.constant dense<0.000000e+00> : vector<2x128xf32>
    %10 = tpu.matmul %8, %9, %cst_8 {dimension_numbers = #tpu.dot_dimension_numbers<[1], [0], [0], [1], [0, 0, 1, 1], [], []>} : vector<2x256xf32>, vector<256x128xf32>, vector<2x128xf32> -> vector<2x128xf32>
    %c0_9 = arith.constant 0 : index
    %c0_10 = arith.constant 0 : index
    %11 = vector.load %arg5[%c0_9, %c0_10] : memref<1x128xf32, #tpu.memory_space<vmem>>, vector<1x128xf32>
    %12 = vector.broadcast %11 : vector<1x128xf32> to vector<2x128xf32>
    %13 = arith.addf %10, %12 : vector<2x128xf32>
    %cst_11 = arith.constant 2.000000e-02 : f32
    %14 = vector.broadcast %cst_11 : f32 to vector<2x128xf32>
    %15 = arith.mulf %14, %13 : vector<2x128xf32>
    %16 = arith.maximumf %13, %15 : vector<2x128xf32>
    %c0_12 = arith.constant 0 : index
    %c0_13 = arith.constant 0 : index
    %17 = vector.load %arg6[%c0_12, %c0_13] : memref<128x64xf32, #tpu.memory_space<vmem>>, vector<128x64xf32>
    %cst_14 = arith.constant dense<0.000000e+00> : vector<2x64xf32>
    %18 = tpu.matmul %16, %17, %cst_14 {dimension_numbers = #tpu.dot_dimension_numbers<[1], [0], [0], [1], [0, 0, 1, 1], [], []>} : vector<2x128xf32>, vector<128x64xf32>, vector<2x64xf32> -> vector<2x64xf32>
    %c0_15 = arith.constant 0 : index
    %c0_16 = arith.constant 0 : index
    %19 = vector.load %arg7[%c0_15, %c0_16] : memref<1x64xf32, #tpu.memory_space<vmem>>, vector<1x64xf32>
    %20 = vector.broadcast %19 : vector<1x64xf32> to vector<2x64xf32>
    %21 = arith.addf %18, %20 : vector<2x64xf32>
    %cst_17 = arith.constant 2.000000e-02 : f32
    %22 = vector.broadcast %cst_17 : f32 to vector<2x64xf32>
    %23 = arith.mulf %22, %21 : vector<2x64xf32>
    %24 = arith.maximumf %21, %23 : vector<2x64xf32>
    %c0_18 = arith.constant 0 : index
    %c0_19 = arith.constant 0 : index
    %25 = vector.load %arg8[%c0_18, %c0_19] : memref<64x32xf32, #tpu.memory_space<vmem>>, vector<64x32xf32>
    %cst_20 = arith.constant dense<0.000000e+00> : vector<2x32xf32>
    %26 = tpu.matmul %24, %25, %cst_20 {dimension_numbers = #tpu.dot_dimension_numbers<[1], [0], [0], [1], [0, 0, 1, 1], [], []>} : vector<2x64xf32>, vector<64x32xf32>, vector<2x32xf32> -> vector<2x32xf32>
    %c0_21 = arith.constant 0 : index
    %c0_22 = arith.constant 0 : index
    %27 = vector.load %arg9[%c0_21, %c0_22] : memref<1x32xf32, #tpu.memory_space<vmem>>, vector<1x32xf32>
    %28 = vector.broadcast %27 : vector<1x32xf32> to vector<2x32xf32>
    %29 = arith.addf %26, %28 : vector<2x32xf32>
    %cst_23 = arith.constant 2.000000e-02 : f32
    %30 = vector.broadcast %cst_23 : f32 to vector<2x32xf32>
    %31 = arith.mulf %30, %29 : vector<2x32xf32>
    %32 = arith.maximumf %29, %31 : vector<2x32xf32>
    %c0_24 = arith.constant 0 : index
    %c0_25 = arith.constant 0 : index
    %33 = vector.load %arg10[%c0_24, %c0_25] : memref<32x32xf32, #tpu.memory_space<vmem>>, vector<32x32xf32>
    %cst_26 = arith.constant dense<0.000000e+00> : vector<2x32xf32>
    %34 = tpu.matmul %32, %33, %cst_26 {dimension_numbers = #tpu.dot_dimension_numbers<[1], [0], [0], [1], [0, 0, 1, 1], [], []>} : vector<2x32xf32>, vector<32x32xf32>, vector<2x32xf32> -> vector<2x32xf32>
    %c0_27 = arith.constant 0 : index
    %c0_28 = arith.constant 0 : index
    %35 = vector.load %arg11[%c0_27, %c0_28] : memref<1x32xf32, #tpu.memory_space<vmem>>, vector<1x32xf32>
    %36 = vector.broadcast %35 : vector<1x32xf32> to vector<2x32xf32>
    %37 = arith.addf %34, %36 : vector<2x32xf32>
    %38 = arith.negf %37 : vector<2x32xf32>
    %39 = math.exp %38 : vector<2x32xf32>
    %cst_29 = arith.constant 1.000000e+00 : f32
    %40 = vector.broadcast %cst_29 : f32 to vector<2x32xf32>
    %41 = arith.addf %40, %39 : vector<2x32xf32>
    %42 = arith.divf %40, %41 : vector<2x32xf32>
    %c0_30 = arith.constant 0 : index
    %c0_31 = arith.constant 0 : index
    %43 = vector.load %arg14[%c0_30, %c0_31] : memref<2x32xf32, #tpu.memory_space<vmem>>, vector<2x32xf32>
    tpu.vector_store %arg14[%c0_30, %c0_31], %42 {strides = array<i32>} : memref<2x32xf32, #tpu.memory_space<vmem>>, vector<2x32xf32>,
    %c0_32 = arith.constant 0 : index
    %c0_33 = arith.constant 0 : index
    %44 = vector.load %arg13[%c0_32, %c0_33] : memref<1x32xf32, #tpu.memory_space<vmem>>, vector<1x32xf32>
    %c0_34 = arith.constant 0 : index
    %c0_35 = arith.constant 0 : index
    %45 = vector.load %arg12[%c0_34, %c0_35] : memref<32x32xf32, #tpu.memory_space<vmem>>, vector<32x32xf32>
    %cst_36 = arith.constant dense<0.000000e+00> : vector<2x32xf32>
    %46 = tpu.matmul %42, %45, %cst_36 {dimension_numbers = #tpu.dot_dimension_numbers<[1], [0], [0], [1], [0, 0, 1, 1], [], []>} : vector<2x32xf32>, vector<32x32xf32>, vector<2x32xf32> -> vector<2x32xf32>
    %47 = vector.broadcast %44 : vector<1x32xf32> to vector<2x32xf32>
    %48 = arith.addf %47, %46 : vector<2x32xf32>
    %c0_37 = arith.constant 0 : index
    %c0_38 = arith.constant 0 : index
    %49 = vector.load %arg15[%c0_37, %c0_38] : memref<2x32xf32, #tpu.memory_space<vmem>>, vector<2x32xf32>
    tpu.vector_store %arg15[%c0_37, %c0_38], %48 {strides = array<i32>} : memref<2x32xf32, #tpu.memory_space<vmem>>, vector<2x32xf32>,
    return
  }
  func.func @transform_0(%arg0: i32) -> (i32, i32) {
    %c0_i32 = arith.constant 0 : i32
    %c0_i32_0 = arith.constant 0 : i32
    %c0_i32_1 = arith.constant 0 : i32
    return %c0_i32, %c0_i32_0 : i32, i32
  }
  func.func @transform_1(%arg0: i32) -> (i32, i32) {
    %c0_i32 = arith.constant 0 : i32
    %c0_i32_0 = arith.constant 0 : i32
    %c0_i32_1 = arith.constant 0 : i32
    return %c0_i32, %c0_i32_0 : i32, i32
  }
  func.func @transform_2(%arg0: i32) -> (i32, i32) {
    %c0_i32 = arith.constant 0 : i32
    %c0_i32_0 = arith.constant 0 : i32
    %c0_i32_1 = arith.constant 0 : i32
    return %c0_i32, %c0_i32_0 : i32, i32
  }
  func.func @transform_3(%arg0: i32) -> (i32, i32) {
    %c0_i32 = arith.constant 0 : i32
    %c0_i32_0 = arith.constant 0 : i32
    %c0_i32_1 = arith.constant 0 : i32
    return %c0_i32, %c0_i32_0 : i32, i32
  }
  func.func @transform_4(%arg0: i32) -> (i32, i32) {
    %c0_i32 = arith.constant 0 : i32
    %c0_i32_0 = arith.constant 0 : i32
    %c0_i32_1 = arith.constant 0 : i32
    return %c0_i32, %c0_i32_0 : i32, i32
  }
  func.func @transform_5(%arg0: i32) -> (i32, i32) {
    %c0_i32 = arith.constant 0 : i32
    %c0_i32_0 = arith.constant 0 : i32
    %c0_i32_1 = arith.constant 0 : i32
    return %c0_i32, %c0_i32_0 : i32, i32
  }
  func.func @transform_6(%arg0: i32) -> (i32, i32) {
    %c0_i32 = arith.constant 0 : i32
    %c0_i32_0 = arith.constant 0 : i32
    %c0_i32_1 = arith.constant 0 : i32
    return %c0_i32, %c0_i32_0 : i32, i32
  }
  func.func @transform_7(%arg0: i32) -> (i32, i32) {
    %c0_i32 = arith.constant 0 : i32
    %c0_i32_0 = arith.constant 0 : i32
    %c0_i32_1 = arith.constant 0 : i32
    return %c0_i32, %c0_i32_0 : i32, i32
  }
  func.func @transform_8(%arg0: i32) -> (i32, i32) {
    %c0_i32 = arith.constant 0 : i32
    %c0_i32_0 = arith.constant 0 : i32
    %c0_i32_1 = arith.constant 0 : i32
    return %c0_i32, %c0_i32_0 : i32, i32
  }
  func.func @transform_9(%arg0: i32) -> (i32, i32) {
    %c0_i32 = arith.constant 0 : i32
    %c0_i32_0 = arith.constant 0 : i32
    %c0_i32_1 = arith.constant 0 : i32
    return %c0_i32, %c0_i32_0 : i32, i32
  }
  func.func @transform_10(%arg0: i32) -> (i32, i32) {
    %c0_i32 = arith.constant 0 : i32
    %c0_i32_0 = arith.constant 0 : i32
    %c0_i32_1 = arith.constant 0 : i32
    return %c0_i32, %c0_i32_0 : i32, i32
  }
  func.func @transform_11(%arg0: i32) -> (i32, i32) {
    %c0_i32 = arith.constant 0 : i32
    %c0_i32_0 = arith.constant 0 : i32
    %c0_i32_1 = arith.constant 0 : i32
    return %c0_i32, %c0_i32_0 : i32, i32
  }
  func.func @transform_12(%arg0: i32) -> (i32, i32) {
    %c0_i32 = arith.constant 0 : i32
    %c0_i32_0 = arith.constant 0 : i32
    %c0_i32_1 = arith.constant 0 : i32
    return %c0_i32, %c0_i32_0 : i32, i32
  }
  func.func @transform_13(%arg0: i32) -> (i32, i32) {
    %c0_i32 = arith.constant 0 : i32
    %c0_i32_0 = arith.constant 0 : i32
    %c0_i32_1 = arith.constant 0 : i32
    return %c0_i32, %c0_i32_0 : i32, i32
  }
  func.func @transform_14(%arg0: i32) -> (i32, i32) {
    %c0_i32 = arith.constant 0 : i32
    %c0_i32_0 = arith.constant 0 : i32
    %c0_i32_1 = arith.constant 0 : i32
    return %c0_i32, %c0_i32_0 : i32, i32
  }
}

module attributes {stable_mosaic.version = 11 : i64} {
  func.func @_generator_kernel(%arg0: i32, %arg1: i32, %arg2: memref<1x4x128xf32, #tpu.memory_space<vmem>>, %arg3: memref<1x32x4xf32, #tpu.memory_space<vmem>>, %arg4: memref<32x32xbf16, #tpu.memory_space<vmem>>, %arg5: memref<8x32xbf16, #tpu.memory_space<vmem>>, %arg6: memref<32x1xf32, #tpu.memory_space<vmem>>, %arg7: memref<8x1xf32, #tpu.memory_space<vmem>>, %arg8: memref<1x8x128xf32, #tpu.memory_space<vmem>>, %arg9: memref<1x1x128xf32, #tpu.memory_space<vmem>>) attributes {dimension_semantics = [#tpu.dimension_semantics<parallel>, #tpu.dimension_semantics<parallel>], iteration_bounds = array<i64: 2, 1>, scalar_prefetch = 0 : i64, scratch_operands = 0 : i64, tpu.core_type = #tpu.core_type<tc>, window_params = [{transform_indices = @transform_0, window_bounds = array<i64: 1, 4, 128>}, {transform_indices = @transform_1, window_bounds = array<i64: 1, 32, 4>}, {pipeline_mode = #tpu.pipeline_mode<synchronous>, transform_indices = @transform_2, window_bounds = array<i64: 32, 32>}, {pipeline_mode = #tpu.pipeline_mode<synchronous>, transform_indices = @transform_3, window_bounds = array<i64: 8, 32>}, {pipeline_mode = #tpu.pipeline_mode<synchronous>, transform_indices = @transform_4, window_bounds = array<i64: 32, 1>}, {pipeline_mode = #tpu.pipeline_mode<synchronous>, transform_indices = @transform_5, window_bounds = array<i64: 8, 1>}, {transform_indices = @transform_6, window_bounds = array<i64: 1, 8, 128>}, {transform_indices = @transform_7, window_bounds = array<i64: 1, 1, 128>}]} {
    %c0 = arith.constant 0 : index
    %c0_0 = arith.constant 0 : index
    %c0_1 = arith.constant 0 : index
    %0 = vector.load %arg2[%c0, %c0_0, %c0_1] : memref<1x4x128xf32, #tpu.memory_space<vmem>>, vector<1x4x128xf32>
    %1 = vector.shape_cast %0 : vector<1x4x128xf32> to vector<4x128xf32>
    %c0_2 = arith.constant 0 : index
    %c0_3 = arith.constant 0 : index
    %c0_4 = arith.constant 0 : index
    %2 = vector.load %arg3[%c0_2, %c0_3, %c0_4] : memref<1x32x4xf32, #tpu.memory_space<vmem>>, vector<1x32x4xf32>
    %3 = vector.shape_cast %2 : vector<1x32x4xf32> to vector<32x4xf32>
    %cst = arith.constant dense<0.000000e+00> : vector<32x128xf32>
    %4 = tpu.matmul %3, %1, %cst {dimension_numbers = #tpu.dot_dimension_numbers<[1], [0], [0], [1], [0, 0, 1, 1], [], []>} : vector<32x4xf32>, vector<4x128xf32>, vector<32x128xf32> -> vector<32x128xf32>
    %5 = arith.truncf %4 : vector<32x128xf32> to vector<32x128xbf16>
    %cst_5 = arith.constant 2.001950e-02 : bf16
    %6 = vector.broadcast %cst_5 : bf16 to vector<32x128xbf16>
    %7 = arith.mulf %6, %5 : vector<32x128xbf16>
    %8 = arith.maximumf %5, %7 : vector<32x128xbf16>
    %c0_6 = arith.constant 0 : index
    %c0_7 = arith.constant 0 : index
    %9 = vector.load %arg4[%c0_6, %c0_7] : memref<32x32xbf16, #tpu.memory_space<vmem>>, vector<32x32xbf16>
    %cst_8 = arith.constant dense<0.000000e+00> : vector<32x128xf32>
    %10 = tpu.matmul %9, %8, %cst_8 {dimension_numbers = #tpu.dot_dimension_numbers<[1], [0], [0], [1], [0, 0, 1, 1], [], []>} : vector<32x32xbf16>, vector<32x128xbf16>, vector<32x128xf32> -> vector<32x128xf32>
    %c0_9 = arith.constant 0 : index
    %c0_10 = arith.constant 0 : index
    %11 = vector.load %arg6[%c0_9, %c0_10] : memref<32x1xf32, #tpu.memory_space<vmem>>, vector<32x1xf32>
    %12 = vector.broadcast %11 : vector<32x1xf32> to vector<32x128xf32>
    %13 = arith.addf %10, %12 : vector<32x128xf32>
    %14 = arith.truncf %13 : vector<32x128xf32> to vector<32x128xbf16>
    %cst_11 = arith.constant 2.001950e-02 : bf16
    %15 = vector.broadcast %cst_11 : bf16 to vector<32x128xbf16>
    %16 = arith.mulf %15, %14 : vector<32x128xbf16>
    %17 = arith.maximumf %14, %16 : vector<32x128xbf16>
    %c0_12 = arith.constant 0 : index
    %c0_13 = arith.constant 0 : index
    %18 = vector.load %arg5[%c0_12, %c0_13] : memref<8x32xbf16, #tpu.memory_space<vmem>>, vector<8x32xbf16>
    %cst_14 = arith.constant dense<0.000000e+00> : vector<8x128xf32>
    %19 = tpu.matmul %18, %17, %cst_14 {dimension_numbers = #tpu.dot_dimension_numbers<[1], [0], [0], [1], [0, 0, 1, 1], [], []>} : vector<8x32xbf16>, vector<32x128xbf16>, vector<8x128xf32> -> vector<8x128xf32>
    %c0_15 = arith.constant 0 : index
    %c0_16 = arith.constant 0 : index
    %20 = vector.load %arg7[%c0_15, %c0_16] : memref<8x1xf32, #tpu.memory_space<vmem>>, vector<8x1xf32>
    %21 = vector.broadcast %20 : vector<8x1xf32> to vector<8x128xf32>
    %22 = arith.addf %19, %21 : vector<8x128xf32>
    %23 = arith.negf %22 : vector<8x128xf32>
    %24 = math.exp %23 : vector<8x128xf32>
    %cst_17 = arith.constant 1.000000e+00 : f32
    %25 = vector.broadcast %cst_17 : f32 to vector<8x128xf32>
    %26 = arith.addf %25, %24 : vector<8x128xf32>
    %27 = arith.divf %25, %26 : vector<8x128xf32>
    %c0_18 = arith.constant 0 : index
    %c0_19 = arith.constant 0 : index
    %c0_20 = arith.constant 0 : index
    %28 = vector.load %arg8[%c0_18, %c0_19, %c0_20] : memref<1x8x128xf32, #tpu.memory_space<vmem>>, vector<1x8x128xf32>
    %29 = vector.shape_cast %28 : vector<1x8x128xf32> to vector<8x128xf32>
    %30 = vector.shape_cast %27 : vector<8x128xf32> to vector<1x8x128xf32>
    tpu.vector_store %arg8[%c0_18, %c0_19, %c0_20], %30 {strides = array<i32>} : memref<1x8x128xf32, #tpu.memory_space<vmem>>, vector<1x8x128xf32>,
    %cst_21 = arith.constant dense<0xFF800000> : vector<128xf32>
    %31 = vector.multi_reduction <maximumf>, %27, %cst_21 [0] : vector<8x128xf32> to vector<128xf32>
    %32 = vector.shape_cast %31 : vector<128xf32> to vector<1x128xf32>
    %c0_22 = arith.constant 0 : index
    %c0_23 = arith.constant 0 : index
    %c0_24 = arith.constant 0 : index
    %33 = vector.load %arg9[%c0_22, %c0_23, %c0_24] : memref<1x1x128xf32, #tpu.memory_space<vmem>>, vector<1x1x128xf32>
    %34 = vector.shape_cast %33 : vector<1x1x128xf32> to vector<1x128xf32>
    %35 = vector.shape_cast %32 : vector<1x128xf32> to vector<1x1x128xf32>
    tpu.vector_store %arg9[%c0_22, %c0_23, %c0_24], %35 {strides = array<i32>} : memref<1x1x128xf32, #tpu.memory_space<vmem>>, vector<1x1x128xf32>,
    return
  }
  func.func @transform_0(%arg0: i32, %arg1: i32) -> (i32, i32, i32) {
    %c0_i32 = arith.constant 0 : i32
    %c0_i32_0 = arith.constant 0 : i32
    return %arg0, %c0_i32, %arg1 : i32, i32, i32
  }
  func.func @transform_1(%arg0: i32, %arg1: i32) -> (i32, i32, i32) {
    %c0_i32 = arith.constant 0 : i32
    %c0_i32_0 = arith.constant 0 : i32
    %c0_i32_1 = arith.constant 0 : i32
    return %arg0, %c0_i32, %c0_i32_0 : i32, i32, i32
  }
  func.func @transform_2(%arg0: i32, %arg1: i32) -> (i32, i32) {
    %c0_i32 = arith.constant 0 : i32
    %c0_i32_0 = arith.constant 0 : i32
    %c0_i32_1 = arith.constant 0 : i32
    return %c0_i32, %c0_i32_0 : i32, i32
  }
  func.func @transform_3(%arg0: i32, %arg1: i32) -> (i32, i32) {
    %c0_i32 = arith.constant 0 : i32
    %c0_i32_0 = arith.constant 0 : i32
    %c0_i32_1 = arith.constant 0 : i32
    return %c0_i32, %c0_i32_0 : i32, i32
  }
  func.func @transform_4(%arg0: i32, %arg1: i32) -> (i32, i32) {
    %c0_i32 = arith.constant 0 : i32
    %c0_i32_0 = arith.constant 0 : i32
    %c0_i32_1 = arith.constant 0 : i32
    return %c0_i32, %c0_i32_0 : i32, i32
  }
  func.func @transform_5(%arg0: i32, %arg1: i32) -> (i32, i32) {
    %c0_i32 = arith.constant 0 : i32
    %c0_i32_0 = arith.constant 0 : i32
    %c0_i32_1 = arith.constant 0 : i32
    return %c0_i32, %c0_i32_0 : i32, i32
  }
  func.func @transform_6(%arg0: i32, %arg1: i32) -> (i32, i32, i32) {
    %c0_i32 = arith.constant 0 : i32
    %c0_i32_0 = arith.constant 0 : i32
    return %arg0, %c0_i32, %arg1 : i32, i32, i32
  }
  func.func @transform_7(%arg0: i32, %arg1: i32) -> (i32, i32, i32) {
    %c0_i32 = arith.constant 0 : i32
    %c0_i32_0 = arith.constant 0 : i32
    return %arg0, %c0_i32, %arg1 : i32, i32, i32
  }
}

</mosaic_0001>

<llo_original>
// kernel: _lambda_.3
$region0: #{_lambda_.3}
  #allocation0 [shape = 'u32[]', space=smem, size = 0x4, offset = 0x4, fixed_abs, tag = 'smem constant byte address 0x4 - core index']
  #allocation1 [shape = 'u32[144,128]{1,0:T(1,128)}', space=vmem, size = 0x12000, scoped, tag = 'internal scratch']
  %s0 = inlined_call_operand.vmem [shape: f32[2,4,128], index: 0, kind: input, shape index: {}]
  %s1 = inlined_call_operand.vmem [shape: f32[2,32,4], index: 1, kind: input, shape index: {}]
  %s2 = inlined_call_operand.vmem [shape: bf16[32,32], index: 2, kind: input, shape index: {}]
  %s3 = inlined_call_operand.vmem [shape: bf16[8,32], index: 3, kind: input, shape index: {}]
  %s4 = inlined_call_operand.vmem [shape: f32[32,1], index: 4, kind: input, shape index: {}]
  %s5 = inlined_call_operand.vmem [shape: f32[8,1], index: 5, kind: input, shape index: {}]
  %s6 = inlined_call_operand.vmem [shape: f32[2,8,128], index: 6, kind: output, shape index: {0}]
  %s7 = inlined_call_operand.vmem [shape: f32[2,1,128], index: 7, kind: output, shape index: {1}]
  %8 = xla_tuple %s6, %s7
  %s9 = sld [smem:[#allocation0]]
  $region65: #{_lambda_.3} parent=0
    _
  %s11 = ssub.s32 1, %s9
  %s12 = scalar_select 0, %s11, %s9
  loop: start=0, step=1, limit=4
  $region2: #{_lambda_.3} parent=0 // loop_pre_header
    _
  $region3: #{_lambda_.3} parent=0 // loop_header
    %s14 = sphi 0, %s18
    %p15 = scmp.ge.s32.totalorder %s14, 4
    %s21 = sphi 0, %s33
    %s22 = sphi 0, %s29
    %s23 = sphi 0, %s21
    %s24 = sphi 0, %s22
    %s25 = sphi 0, %s23
    %s26 = sphi 0, %s24
    %s38 = sphi 0, %s40
    %s41 = sphi 0, %s38
    %s42 = sphi 0, %s41
    %s58 = sphi 0, %s42
    %s64 = sphi 0, %s66
    %s67 = sphi 0, %s64
    %s68 = sphi 0, %s67
    %s84 = sphi 0, %s68
    %s88 = sphi 0, %s88
    %s90 = sphi 0, %s88
    %s91 = sphi 0, %s90
    %s105 = sphi 0, %s91
    %s109 = sphi 0, %s109
    %s111 = sphi 0, %s109
    %s112 = sphi 0, %s111
    %s126 = sphi 0, %s112
    %s130 = sphi 0, %s130
    %s132 = sphi 0, %s130
    %s133 = sphi 0, %s132
    %s147 = sphi 0, %s133
    %s151 = sphi 0, %s151
    %s153 = sphi 0, %s151
    %s154 = sphi 0, %s153
    %s168 = sphi 0, %s154
    %s176 = sphi 0, %s178
    %s179 = sphi 0, %s176
    %s180 = sphi 0, %s179
    %s196 = sphi 0, %s180
    %s204 = sphi 0, %s206
    %s207 = sphi 0, %s204
    %s208 = sphi 0, %s207
    %s224 = sphi 0, %s208
  $region4: #{_lambda_.3} parent=0 // loop_header_branch
    %17 = sbr.rel (%p15) target = $region8
  $region5: #{_lambda_.3} parent=0 // loop_body
    %s19 = ssub.s32 %s14, 1
    %s20 = ssub.s32 %s14, 2
    %s27 = sadd.s32 1, %s22
    %p28 = scmp.ge.s32.totalorder %s27, 1
    %s29 = scalar_select %p28, 0, %s27
    %s30 = sadd.s32 1, %s21
    %s31 = scalar_select %p28, %s30, %s21
    %p32 = scmp.ge.s32.totalorder %s31, 2
    %s33 = scalar_select %p32, 0, %s31
    %s34 = ssub.s32 %s21, %s33
    %s35 = ssub.s32 %s22, %s29
    %s36 = sor.u32 %s34, %s35
    %p37 = scmp.eq.s32.totalorder %s36, 0
    %s39 = sadd.s32 %s38, 1
    %s40 = scalar_select %p37, %s38, %s39
    %p43 = pneg %p37
    %p44 = scmp.eq.s32.totalorder %s14, 1
    %p45 = por %p43, %p44
    %p46 = scmp.ne.s32.totalorder %s38, %s41
    %p47 = scmp.eq.s32.totalorder %s14, 0
    %p48 = por %p46, %p47
    %p49 = scmp.ne.s32.totalorder %s38, %s41
    %p50 = scmp.eq.s32.totalorder %s19, 1
    %p51 = por %p49, %p50
    %p52 = scmp.ne.s32.totalorder %s41, %s42
    %p53 = scmp.eq.s32.totalorder %s19, 0
    %p54 = por %p52, %p53
    %p55 = scmp.ne.s32.totalorder %s41, %s42
    %p56 = scmp.eq.s32.totalorder %s20, 1
    %p57 = por %p55, %p56
    %p59 = scmp.ne.s32.totalorder %s42, %s58
    %p60 = scmp.eq.s32.totalorder %s20, 0
    %p61 = por %p59, %p60
    %s62 = ssub.s32 %s21, %s33
    %p63 = scmp.eq.s32.totalorder %s62, 0
    %s65 = sadd.s32 %s64, 1
    %s66 = scalar_select %p63, %s64, %s65
    %p69 = pneg %p63
    %p70 = scmp.eq.s32.totalorder %s14, 1
    %p71 = por %p69, %p70
    %p72 = scmp.ne.s32.totalorder %s64, %s67
    %p73 = scmp.eq.s32.totalorder %s14, 0
    %p74 = por %p72, %p73
    %p75 = scmp.ne.s32.totalorder %s64, %s67
    %p76 = scmp.eq.s32.totalorder %s19, 1
    %p77 = por %p75, %p76
    %p78 = scmp.ne.s32.totalorder %s67, %s68
    %p79 = scmp.eq.s32.totalorder %s19, 0
    %p80 = por %p78, %p79
    %p81 = scmp.ne.s32.totalorder %s67, %s68
    %p82 = scmp.eq.s32.totalorder %s20, 1
    %p83 = por %p81, %p82
    %p85 = scmp.ne.s32.totalorder %s68, %s84
    %p86 = scmp.eq.s32.totalorder %s20, 0
    %p87 = por %p85, %p86
    %s89 = sadd.s32 %s88, 1
    %p92 = scmp.eq.s32.totalorder %s14, 1
    %p93 = scmp.ne.s32.totalorder %s88, %s90
    %p94 = scmp.eq.s32.totalorder %s14, 0
    %p95 = por %p93, %p94
    %p96 = scmp.ne.s32.totalorder %s88, %s90
    %p97 = scmp.eq.s32.totalorder %s19, 1
    %p98 = por %p96, %p97
    %p99 = scmp.ne.s32.totalorder %s90, %s91
    %p100 = scmp.eq.s32.totalorder %s19, 0
    %p101 = por %p99, %p100
    %p102 = scmp.ne.s32.totalorder %s90, %s91
    %p103 = scmp.eq.s32.totalorder %s20, 1
    %p104 = por %p102, %p103
    %p106 = scmp.ne.s32.totalorder %s91, %s105
    %p107 = scmp.eq.s32.totalorder %s20, 0
    %p108 = por %p106, %p107
    %s110 = sadd.s32 %s109, 1
    %p113 = scmp.eq.s32.totalorder %s14, 1
    %p114 = scmp.ne.s32.totalorder %s109, %s111
    %p115 = scmp.eq.s32.totalorder %s14, 0
    %p116 = por %p114, %p115
    %p117 = scmp.ne.s32.totalorder %s109, %s111
    %p118 = scmp.eq.s32.totalorder %s19, 1
    %p119 = por %p117, %p118
    %p120 = scmp.ne.s32.totalorder %s111, %s112
    %p121 = scmp.eq.s32.totalorder %s19, 0
    %p122 = por %p120, %p121
    %p123 = scmp.ne.s32.totalorder %s111, %s112
    %p124 = scmp.eq.s32.totalorder %s20, 1
    %p125 = por %p123, %p124
    %p127 = scmp.ne.s32.totalorder %s112, %s126
    %p128 = scmp.eq.s32.totalorder %s20, 0
    %p129 = por %p127, %p128
    %s131 = sadd.s32 %s130, 1
    %p134 = scmp.eq.s32.totalorder %s14, 1
    %p135 = scmp.ne.s32.totalorder %s130, %s132
    %p136 = scmp.eq.s32.totalorder %s14, 0
    %p137 = por %p135, %p136
    %p138 = scmp.ne.s32.totalorder %s130, %s132
    %p139 = scmp.eq.s32.totalorder %s19, 1
    %p140 = por %p138, %p139
    %p141 = scmp.ne.s32.totalorder %s132, %s133
    %p142 = scmp.eq.s32.totalorder %s19, 0
    %p143 = por %p141, %p142
    %p144 = scmp.ne.s32.totalorder %s132, %s133
    %p145 = scmp.eq.s32.totalorder %s20, 1
    %p146 = por %p144, %p145
    %p148 = scmp.ne.s32.totalorder %s133, %s147
    %p149 = scmp.eq.s32.totalorder %s20, 0
    %p150 = por %p148, %p149
    %s152 = sadd.s32 %s151, 1
    %p155 = scmp.eq.s32.totalorder %s14, 1
    %p156 = scmp.ne.s32.totalorder %s151, %s153
    %p157 = scmp.eq.s32.totalorder %s14, 0
    %p158 = por %p156, %p157
    %p159 = scmp.ne.s32.totalorder %s151, %s153
    %p160 = scmp.eq.s32.totalorder %s19, 1
    %p161 = por %p159, %p160
    %p162 = scmp.ne.s32.totalorder %s153, %s154
    %p163 = scmp.eq.s32.totalorder %s19, 0
    %p164 = por %p162, %p163
    %p165 = scmp.ne.s32.totalorder %s153, %s154
    %p166 = scmp.eq.s32.totalorder %s20, 1
    %p167 = por %p165, %p166
    %p169 = scmp.ne.s32.totalorder %s154, %s168
    %p170 = scmp.eq.s32.totalorder %s20, 0
    %p171 = por %p169, %p170
    %s172 = ssub.s32 %s21, %s33
    %s173 = ssub.s32 %s22, %s29
    %s174 = sor.u32 %s172, %s173
    %p175 = scmp.eq.s32.totalorder %s174, 0
    %s177 = sadd.s32 %s176, 1
    %s178 = scalar_select %p175, %s176, %s177
    %p181 = pneg %p175
    %p182 = scmp.eq.s32.totalorder %s14, 1
    %p183 = por %p181, %p182
    %p184 = scmp.ne.s32.totalorder %s176, %s179
    %p185 = scmp.eq.s32.totalorder %s14, 0
    %p186 = por %p184, %p185
    %p187 = scmp.ne.s32.totalorder %s176, %s179
    %p188 = scmp.eq.s32.totalorder %s19, 1
    %p189 = por %p187, %p188
    %p190 = scmp.ne.s32.totalorder %s179, %s180
    %p191 = scmp.eq.s32.totalorder %s19, 0
    %p192 = por %p190, %p191
    %p193 = scmp.ne.s32.totalorder %s179, %s180
    %p194 = scmp.eq.s32.totalorder %s20, 1
    %p195 = por %p193, %p194
    %p197 = scmp.ne.s32.totalorder %s180, %s196
    %p198 = scmp.eq.s32.totalorder %s20, 0
    %p199 = por %p197, %p198
    %s200 = ssub.s32 %s21, %s33
    %s201 = ssub.s32 %s22, %s29
    %s202 = sor.u32 %s200, %s201
    %p203 = scmp.eq.s32.totalorder %s202, 0
    %s205 = sadd.s32 %s204, 1
    %s206 = scalar_select %p203, %s204, %s205
    %p209 = pneg %p203
    %p210 = scmp.eq.s32.totalorder %s14, 1
    %p211 = por %p209, %p210
    %p212 = scmp.ne.s32.totalorder %s204, %s207
    %p213 = scmp.eq.s32.totalorder %s14, 0
    %p214 = por %p212, %p213
    %p215 = scmp.ne.s32.totalorder %s204, %s207
    %p216 = scmp.eq.s32.totalorder %s19, 1
    %p217 = por %p215, %p216
    %p218 = scmp.ne.s32.totalorder %s207, %s208
    %p219 = scmp.eq.s32.totalorder %s19, 0
    %p220 = por %p218, %p219
    %p221 = scmp.ne.s32.totalorder %s207, %s208
    %p222 = scmp.eq.s32.totalorder %s20, 1
    %p223 = por %p221, %p222
    %p225 = scmp.ne.s32.totalorder %s208, %s224
    %p226 = scmp.eq.s32.totalorder %s20, 0
    %p227 = por %p225, %p226
    %p228 = scmp.le.s32.totalorder 1, %s14
    %p229 = scmp.lt.s32.totalorder %s14, 3
    %p230 = pnand %p228, %p229
    %p231 = pneg %p230
    // Predicated region
    $region9: #{_lambda_.3} parent=5 // pred_check
      _
    $region10: #{_lambda_.3} parent=5 // pred_check_branch
      %233 = sbr.rel (%p230) target = $region12
    $region11: #{_lambda_.3} parent=5 // pred_region
      %s234 = ssub.s32 %s14, 1
      // Predicated region
      $region13: #{_lambda_.3} parent=11 // pred_check
        %p235 = pneg %p101
      $region14: #{_lambda_.3} parent=11 // pred_check_branch
        %237 = sbr.rel (%p235) target = $region16
      $region15: #{_lambda_.3} parent=11 // pred_region
        _
      $region16: #{_lambda_.3} parent=11 // pred_fallthru
        _
      // Predicated region
      $region17: #{_lambda_.3} parent=11 // pred_check
        %p238 = pneg %p122
      $region18: #{_lambda_.3} parent=11 // pred_check_branch
        %240 = sbr.rel (%p238) target = $region20
      $region19: #{_lambda_.3} parent=11 // pred_region
        _
      $region20: #{_lambda_.3} parent=11 // pred_fallthru
        _
      // Predicated region
      $region21: #{_lambda_.3} parent=11 // pred_check
        %p241 = pneg %p143
      $region22: #{_lambda_.3} parent=11 // pred_check_branch
        %243 = sbr.rel (%p241) target = $region24
      $region23: #{_lambda_.3} parent=11 // pred_region
        _
      $region24: #{_lambda_.3} parent=11 // pred_fallthru
        _
      // Predicated region
      $region25: #{_lambda_.3} parent=11 // pred_check
        %p244 = pneg %p164
      $region26: #{_lambda_.3} parent=11 // pred_check_branch
        %246 = sbr.rel (%p244) target = $region28
      $region27: #{_lambda_.3} parent=11 // pred_region
        _
      $region28: #{_lambda_.3} parent=11 // pred_fallthru
        _
    $region12: #{_lambda_.3} parent=5 // pred_fallthru
      _
    %p247 = scmp.lt.s32.totalorder %s14, 2
    // Predicated region
    $region29: #{_lambda_.3} parent=5 // pred_check
      %p248 = pneg %p247
    $region30: #{_lambda_.3} parent=5 // pred_check_branch
      %250 = sbr.rel (%p248) target = $region32
    $region31: #{_lambda_.3} parent=5 // pred_region
      // Predicated region
      $region33: #{_lambda_.3} parent=31 // pred_check
        %p251 = pneg %p48
      $region34: #{_lambda_.3} parent=31 // pred_check_branch
        %253 = sbr.rel (%p251) target = $region36
      $region35: #{_lambda_.3} parent=31 // pred_region
        %p254 = scmp.lt.s32.totalorder %s21, 1
        %s255 = scalar_select %p254, %s21, 1
        %p256 = scmp.lt.s32.totalorder %s22, 0
        %s257 = scalar_select %p256, %s22, 0
        %s258 = sadd.s32 %s257, %s255
        %s259 = smul.addr %s258, 4
        %s260 = scalar_lea.vmem %s0, %s259
      $region36: #{_lambda_.3} parent=31 // pred_fallthru
        _
      // Predicated region
      $region37: #{_lambda_.3} parent=31 // pred_check
        %p261 = pneg %p74
      $region38: #{_lambda_.3} parent=31 // pred_check_branch
        %263 = sbr.rel (%p261) target = $region40
      $region39: #{_lambda_.3} parent=31 // pred_region
        %p264 = scmp.lt.s32.totalorder %s21, 1
        %s265 = scalar_select %p264, %s21, 1
        %s266 = smul.addr %s265, 4
        %s267 = smul.addr %s266, 8
        %s268 = scalar_lea.vmem %s1, %s267
      $region40: #{_lambda_.3} parent=31 // pred_fallthru
        _
    $region32: #{_lambda_.3} parent=5 // pred_fallthru
      _
    %p269 = scmp.le.s32.totalorder 1, %s14
    %p270 = scmp.lt.s32.totalorder %s14, 3
    %p271 = pnand %p269, %p270
    %p272 = pneg %p271
    // Predicated region
    $region41: #{_lambda_.3} parent=5 // pred_check
      _
    $region42: #{_lambda_.3} parent=5 // pred_check_branch
      %274 = sbr.rel (%p271) target = $region44
    $region43: #{_lambda_.3} parent=5 // pred_region
      %s275 = ssub.s32 %s14, 1
      %p276 = scmp.lt.s32.totalorder %s23, 1
      %s277 = scalar_select %p276, %s23, 1
      %p278 = scmp.lt.s32.totalorder %s24, 0
      %s279 = scalar_select %p278, %s24, 0
      %s280 = sadd.s32 %s279, %s277
      %s281 = smul.addr %s280, 4
      %s282 = scalar_lea.vmem %s0, %s281
      %p283 = pneg %p54
      %p284 = pneg %p51
      %p285 = scmp.lt.s32.totalorder %s23, 1
      %s286 = scalar_select %p285, %s23, 1
      %s287 = smul.addr %s286, 4
      %s288 = smul.addr %s287, 8
      %s289 = scalar_lea.vmem %s1, %s288
      %p290 = pneg %p80
      %p291 = pneg %p77
      %p292 = pneg %p101
      %p293 = pneg %p98
      %p294 = pneg %p122
      %p295 = pneg %p119
      %p296 = pneg %p143
      %p297 = pneg %p140
      %p298 = pneg %p164
      %p299 = pneg %p161
      %p300 = pneg %p192
      %p301 = pneg %p189
      %p302 = scmp.lt.s32.totalorder %s23, 1
      %s303 = scalar_select %p302, %s23, 1
      %p304 = scmp.lt.s32.totalorder %s24, 0
      %s305 = scalar_select %p304, %s24, 0
      %s306 = sadd.s32 %s305, %s303
      %s307 = smul.addr %s306, 8
      %s308 = scalar_lea.vmem %s6, %s307
      %p309 = pneg %p220
      %p310 = pneg %p217
      %p311 = scmp.lt.s32.totalorder %s23, 1
      %s312 = scalar_select %p311, %s23, 1
      %p313 = scmp.lt.s32.totalorder %s24, 0
      %s314 = scalar_select %p313, %s24, 0
      %s315 = sadd.s32 %s314, %s312
      %s316 = scalar_lea.vmem %s7, %s315
      %p317 = scmp.lt.s32.totalorder %s23, 1
      %s318 = scalar_select %p317, %s23, 1
      %p319 = scmp.lt.s32.totalorder %s24, 0
      %s320 = scalar_select %p319, %s24, 0
      %s321 = sadd.s32 %s320, %s318
      %s322 = smul.addr %s321, 4
      %s323 = scalar_lea.vmem %s0, %s322
      %p324 = scmp.lt.s32.totalorder %s23, 1
      %s325 = scalar_select %p324, %s23, 1
      %s326 = smul.addr %s325, 4
      %s327 = smul.addr %s326, 8
      %s328 = scalar_lea.vmem %s1, %s327
      %p329 = scmp.lt.s32.totalorder %s23, 1
      %s330 = scalar_select %p329, %s23, 1
      %p331 = scmp.lt.s32.totalorder %s24, 0
      %s332 = scalar_select %p331, %s24, 0
      %s333 = sadd.s32 %s332, %s330
      %s334 = smul.addr %s333, 8
      %s335 = scalar_lea.vmem %s6, %s334
      %p336 = scmp.lt.s32.totalorder %s23, 1
      %s337 = scalar_select %p336, %s23, 1
      %p338 = scmp.lt.s32.totalorder %s24, 0
      %s339 = scalar_select %p338, %s24, 0
      %s340 = sadd.s32 %s339, %s337
      %s341 = scalar_lea.vmem %s7, %s340
      %v344 = vld [vmem:[%s323] sm:$0xf]
      %v345 = vld [vmem:[%s328] sm:$0xff]
      %v346 = vld [vmem:[%s328 + $0x8] sm:$0xff]
      %v347 = vld [vmem:[%s328 + $0x10] sm:$0xff]
      %v348 = vld [vmem:[%s328 + $0x18] sm:$0xff]
      %vm349 = vcmask 31744
      %v351 = vsel %vm349, %v345, 0
      %v354 = vsel %vm349, %v346, 0
      %v357 = vsel %vm349, %v347, 0
      %v360 = vsel %vm349, %v348, 0
      %vm362 = vcmask 1043456
      %v364 = vsel %vm362, %v344, 0
      %366 = vmatprep.subr.mxu0 0.0
      %367 = vmatpush1.msra.mxu0 %v364
      %368 = vmatprep.subr.mxu0 0.0
      %369 = vmatpush1.msra.mxu0 0.0
      %370 = vmatprep.subr.mxu0 0.0
      %371 = vmatpush1.msra.mxu0 0.0
      %372 = vmatprep.subr.mxu0 0.0
      %373 = vmatpush1.msra.mxu0 0.0
      %374 = vmatprep.subr.mxu0 0.0
      %375 = vmatpush1.msra.mxu0 0.0
      %376 = vmatprep.subr.mxu0 0.0
      %377 = vmatpush1.msra.mxu0 0.0
      %378 = vmatprep.subr.mxu0 0.0
      %379 = vmatpush1.msra.mxu0 0.0
      %380 = vmatprep.subr.mxu0 0.0
      %381 = vmatpush1.msra.mxu0 0.0
      %382 = vmatprep.subr.mxu0 0.0
      %383 = vmatpush1.msra.mxu0 0.0
      %384 = vmatprep.subr.mxu0 0.0
      %385 = vmatpush1.msra.mxu0 0.0
      %386 = vmatprep.subr.mxu0 0.0
      %387 = vmatpush1.msra.mxu0 0.0
      %388 = vmatprep.subr.mxu0 0.0
      %389 = vmatpush1.msra.mxu0 0.0
      %390 = vmatprep.subr.mxu0 0.0
      %391 = vmatpush1.msra.mxu0 0.0
      %392 = vmatprep.subr.mxu0 0.0
      %393 = vmatpush1.msra.mxu0 0.0
      %394 = vmatprep.subr.mxu0 0.0
      %395 = vmatpush1.msra.mxu0 0.0
      %396 = vmatprep.subr.mxu0 0.0
      %397 = vmatpush1.msra.mxu0 0.0
      %398 = vmatprep.subr.mxu0 0.0
      %399 = vmatpush1.msra.mxu0 0.0
      %400 = vmatprep.subr.mxu0 0.0
      %401 = vmatpush1.msra.mxu0 0.0
      %402 = vmatprep.subr.mxu0 0.0
      %403 = vmatpush1.msra.mxu0 0.0
      %404 = vmatprep.subr.mxu0 0.0
      %405 = vmatpush1.msra.mxu0 0.0
      %406 = vmatprep.subr.mxu0 0.0
      %407 = vmatpush1.msra.mxu0 0.0
      %408 = vmatprep.subr.mxu0 0.0
      %409 = vmatpush1.msra.mxu0 0.0
      %410 = vmatprep.subr.mxu0 0.0
      %411 = vmatpush1.msra.mxu0 0.0
      %412 = vmatprep.subr.mxu0 0.0
      %413 = vmatpush1.msra.mxu0 0.0
      %414 = vmatprep.subr.mxu0 0.0
      %415 = vmatpush1.msra.mxu0 0.0
      %416 = vmatprep.subr.mxu0 0.0
      %417 = vmatpush1.msra.mxu0 0.0
      %418 = vmatprep.subr.mxu0 0.0
      %419 = vmatpush1.msra.mxu0 0.0
      %420 = vmatprep.subr.mxu0 0.0
      %421 = vmatpush1.msra.mxu0 0.0
      %422 = vmatprep.subr.mxu0 0.0
      %423 = vmatpush1.msra.mxu0 0.0
      %424 = vmatprep.subr.mxu0 0.0
      %425 = vmatpush1.msra.mxu0 0.0
      %426 = vmatprep.subr.mxu0 0.0
      %427 = vmatpush1.msra.mxu0 0.0
      %428 = vmatprep.subr.mxu0 0.0
      %429 = vmatpush1.msra.mxu0 0.0
      %430 = vmatprep.mubr.f32.mxu0 0.0
      %431 = vmatmul.mubr.f32.gmra.mrb[0].mxu0 %v351
      %v432 = vpop.f32.mrb[0].mxu0
      %v433 = vadd.f32 0.0, %v432
      %v434 = vpop.f32.mrb[0].mxu0
      %435 = vmatprep.mubr.f32.mxu0 0.0
      %436 = vmatmul.mubr.f32.gmra.mrb[0].mxu0 %v354
      %v437 = vpop.f32.mrb[0].mxu0
      %v438 = vadd.f32 0.0, %v437
      %v439 = vpop.f32.mrb[0].mxu0
      %440 = vmatprep.mubr.f32.mxu0 0.0
      %441 = vmatmul.mubr.f32.gmra.mrb[0].mxu0 %v357
      %v442 = vpop.f32.mrb[0].mxu0
      %v443 = vadd.f32 0.0, %v442
      %v444 = vpop.f32.mrb[0].mxu0
      %445 = vmatprep.mubr.f32.mxu0 0.0
      %446 = vmatmul.mubr.f32.gmra.mrb[0].mxu0 %v360
      %v447 = vpop.f32.mrb[0].mxu0
      %v448 = vadd.f32 0.0, %v447
      %v449 = vpop.f32.mrb[0].mxu0
      %450 = vdwg.mxu0
      %v451 = vpack.c.bf16 %v438, %v433
      %v452 = vpack.c.bf16 %v448, %v443
      %v453 = vmul.bf16 %v451, 1017396388
      %v454 = vmul.bf16 %v452, 1017396388
      %v455 = vmax.bf16 %v451, %v453
      %v456 = vmax.bf16 %v452, %v454
      %v457 = vld [vmem:[%s2] sm:$0xf]
      %v458 = vld [vmem:[%s2 + $0x4] sm:$0xf]
      %v459 = vld [vmem:[%s2 + $0x8] sm:$0xf]
      %v460 = vld [vmem:[%s2 + $0xc] sm:$0xf]
      %v461 = vld [vmem:[%s4] sm:$0xff]
      %v462 = vld [vmem:[%s4 + $0x8] sm:$0xff]
      %v463 = vld [vmem:[%s4 + $0x10] sm:$0xff]
      %v464 = vld [vmem:[%s4 + $0x18] sm:$0xff]
      %466 = vset.pattern.permute.xlu0 0
      %467 = vperm.xlu0 %466, %v461
      %v468 = vpop.permute.xlu0 %467
      %471 = vset.pattern.permute.xlu0 0
      %472 = vperm.xlu0 %471, %v462
      %v473 = vpop.permute.xlu0 %472
      %476 = vset.pattern.permute.xlu0 0
      %477 = vperm.xlu0 %476, %v463
      %v478 = vpop.permute.xlu0 %477
      %481 = vset.pattern.permute.xlu0 0
      %482 = vperm.xlu0 %481, %v464
      %v483 = vpop.permute.xlu0 %482
      %v489 = vunpack.c.l.b16 %v457
      %v490 = vunpack.c.l.b16 %v458
      %v491 = vunpack.c.l.b16 %v459
      %v492 = vunpack.c.l.b16 %v460
      %v493 = vpack.c.b16 %v490, %v489
      %v494 = vpack.c.b16 %v492, %v491
      %vm495 = vcmask 261120
      %v497 = vsel %vm495, %v493, 0
      %v500 = vsel %vm495, %v494, 0
      %502 = vmatprep.subr.bf16.mxu0 0
      %503 = vmatpush1.bf16.msra.mxu0 %v455
      %504 = vmatprep.subr.bf16.mxu0 0
      %505 = vmatpush1.bf16.msra.mxu0 %v456
      %506 = vmatprep.subr.bf16.mxu0 0
      %507 = vmatpush1.bf16.msra.mxu0 0
      %508 = vmatprep.subr.bf16.mxu0 0
      %509 = vmatpush1.bf16.msra.mxu0 0
      %510 = vmatprep.subr.bf16.mxu0 0
      %511 = vmatpush1.bf16.msra.mxu0 0
      %512 = vmatprep.subr.bf16.mxu0 0
      %513 = vmatpush1.bf16.msra.mxu0 0
      %514 = vmatprep.subr.bf16.mxu0 0
      %515 = vmatpush1.bf16.msra.mxu0 0
      %516 = vmatprep.subr.bf16.mxu0 0
      %517 = vmatpush1.bf16.msra.mxu0 0
      %518 = vmatprep.subr.bf16.mxu0 0
      %519 = vmatpush1.bf16.msra.mxu0 0
      %520 = vmatprep.subr.bf16.mxu0 0
      %521 = vmatpush1.bf16.msra.mxu0 0
      %522 = vmatprep.subr.bf16.mxu0 0
      %523 = vmatpush1.bf16.msra.mxu0 0
      %524 = vmatprep.subr.bf16.mxu0 0
      %525 = vmatpush1.bf16.msra.mxu0 0
      %526 = vmatprep.subr.bf16.mxu0 0
      %527 = vmatpush1.bf16.msra.mxu0 0
      %528 = vmatprep.subr.bf16.mxu0 0
      %529 = vmatpush1.bf16.msra.mxu0 0
      %530 = vmatprep.subr.bf16.mxu0 0
      %531 = vmatpush1.bf16.msra.mxu0 0
      %532 = vmatprep.subr.bf16.mxu0 0
      %533 = vmatpush1.bf16.msra.mxu0 0
      %534 = vmatprep.mubr.bf16.mxu0 0
      %535 = vmatmul.mubr.bf16.gmra.mrb[0].mxu0 %v497
      %v536 = vpop.f32.mrb[0].mxu0
      %v537 = vadd.f32 %v468, %v536
      %v538 = vpop.f32.mrb[0].mxu0
      %v539 = vpop.f32.mrb[0].mxu0
      %v540 = vadd.f32 %v473, %v539
      %v541 = vpop.f32.mrb[0].mxu0
      %542 = vmatprep.mubr.bf16.mxu0 0
      %543 = vmatmul.mubr.bf16.gmra.mrb[0].mxu0 %v500
      %v544 = vpop.f32.mrb[0].mxu0
      %v545 = vadd.f32 %v478, %v544
      %v546 = vpop.f32.mrb[0].mxu0
      %v547 = vpop.f32.mrb[0].mxu0
      %v548 = vadd.f32 %v483, %v547
      %v549 = vpop.f32.mrb[0].mxu0
      %550 = vdwg.mxu0
      %v551 = vpack.c.bf16 %v540, %v537
      %v552 = vpack.c.bf16 %v548, %v545
      %v553 = vmul.bf16 %v551, 1017396388
      %v554 = vmul.bf16 %v552, 1017396388
      %v555 = vmax.bf16 %v551, %v553
      %v556 = vmax.bf16 %v552, %v554
      %v557 = vld [vmem:[%s3] sm:$0xf]
      %v558 = vld [vmem:[%s5] sm:$0xff]
      %560 = vset.pattern.permute.xlu0 0
      %561 = vperm.xlu0 %560, %v558
      %v562 = vpop.permute.xlu0 %561
      %v565 = vsel %vm495, %v557, 0
      %567 = vmatprep.subr.bf16.mxu0 0
      %568 = vmatpush1.bf16.msra.mxu0 %v555
      %569 = vmatprep.subr.bf16.mxu0 0
      %570 = vmatpush1.bf16.msra.mxu0 %v556
      %571 = vmatprep.subr.bf16.mxu0 0
      %572 = vmatpush1.bf16.msra.mxu0 0
      %573 = vmatprep.subr.bf16.mxu0 0
      %574 = vmatpush1.bf16.msra.mxu0 0
      %575 = vmatprep.subr.bf16.mxu0 0
      %576 = vmatpush1.bf16.msra.mxu0 0
      %577 = vmatprep.subr.bf16.mxu0 0
      %578 = vmatpush1.bf16.msra.mxu0 0
      %579 = vmatprep.subr.bf16.mxu0 0
      %580 = vmatpush1.bf16.msra.mxu0 0
      %581 = vmatprep.subr.bf16.mxu0 0
      %582 = vmatpush1.bf16.msra.mxu0 0
      %583 = vmatprep.subr.bf16.mxu0 0
      %584 = vmatpush1.bf16.msra.mxu0 0
      %585 = vmatprep.subr.bf16.mxu0 0
      %586 = vmatpush1.bf16.msra.mxu0 0
      %587 = vmatprep.subr.bf16.mxu0 0
      %588 = vmatpush1.bf16.msra.mxu0 0
      %589 = vmatprep.subr.bf16.mxu0 0
      %590 = vmatpush1.bf16.msra.mxu0 0
      %591 = vmatprep.subr.bf16.mxu0 0
      %592 = vmatpush1.bf16.msra.mxu0 0
      %593 = vmatprep.subr.bf16.mxu0 0
      %594 = vmatpush1.bf16.msra.mxu0 0
      %595 = vmatprep.subr.bf16.mxu0 0
      %596 = vmatpush1.bf16.msra.mxu0 0
      %597 = vmatprep.subr.bf16.mxu0 0
      %598 = vmatpush1.bf16.msra.mxu0 0
      %599 = vmatprep.mubr.bf16.mxu0 0
      %600 = vmatmul.mubr.bf16.gmra.mrb[0].mxu0 %v565
      %v601 = vpop.f32.mrb[0].mxu0
      %v602 = vadd.f32 %v562, %v601
      %v603 = vpop.f32.mrb[0].mxu0
      %v604 = vpop.f32.mrb[0].mxu0
      %v605 = vpop.f32.mrb[0].mxu0
      %606 = vdwg.mxu0
      %v607 = vxor.u32 %v602, 2147483648
      %v608 = vmul.f32 %v607, 1.442695
      %v609 = vpow.pop %v608
      %v610 = vadd.f32 %v609, 1.0
      %v611 = vrcp.pop %v610
      %v612 = vmul.f32 1.0, %v611
      %613 = vst [vmem:[%s335] sm:$0xff] %v612
      %v614 = vrot.slane %v612, 4
      %v615 = vmax.f32 %v612, %v614
      %v616 = vrot.slane %v615, 2
      %v617 = vmax.f32 %v615, %v616
      %v618 = vrot.slane %v617, 1
      %v619 = vmax.f32 %v617, %v618
      %620 = vst [vmem:[%s341] sm:$0x1] %v619
      %p621 = scmp.lt.s32.totalorder %s23, 1
      %s622 = scalar_select %p621, %s23, 1
      %p623 = scmp.lt.s32.totalorder %s24, 0
      %s624 = scalar_select %p623, %s24, 0
      %s625 = sadd.s32 %s624, %s622
      %s626 = smul.addr %s625, 8
      %s627 = scalar_lea.vmem %s6, %s626
      %p628 = scmp.lt.s32.totalorder %s23, 1
      %s629 = scalar_select %p628, %s23, 1
      %p630 = scmp.lt.s32.totalorder %s24, 0
      %s631 = scalar_select %p630, %s24, 0
      %s632 = sadd.s32 %s631, %s629
      %s633 = scalar_lea.vmem %s7, %s632
      // Predicated region
      $region45: #{_lambda_.3} parent=43 // pred_check
        %p634 = pneg %p189
      $region46: #{_lambda_.3} parent=43 // pred_check_branch
        %636 = sbr.rel (%p634) target = $region48
      $region47: #{_lambda_.3} parent=43 // pred_region
        _
      $region48: #{_lambda_.3} parent=43 // pred_fallthru
        _
      // Predicated region
      $region49: #{_lambda_.3} parent=43 // pred_check
        %p637 = pneg %p217
      $region50: #{_lambda_.3} parent=43 // pred_check_branch
        %639 = sbr.rel (%p637) target = $region52
      $region51: #{_lambda_.3} parent=43 // pred_region
        _
      $region52: #{_lambda_.3} parent=43 // pred_fallthru
        _
    $region44: #{_lambda_.3} parent=5 // pred_fallthru
      _
    %p640 = scmp.le.s32.totalorder 2, %s14
    // Predicated region
    $region53: #{_lambda_.3} parent=5 // pred_check
      %p641 = pneg %p640
    $region54: #{_lambda_.3} parent=5 // pred_check_branch
      %643 = sbr.rel (%p641) target = $region56
    $region55: #{_lambda_.3} parent=5 // pred_region
      %s644 = ssub.s32 %s14, 2
      // Predicated region
      $region57: #{_lambda_.3} parent=55 // pred_check
        %p645 = pneg %p195
      $region58: #{_lambda_.3} parent=55 // pred_check_branch
        %647 = sbr.rel (%p645) target = $region60
      $region59: #{_lambda_.3} parent=55 // pred_region
        %p648 = scmp.lt.s32.totalorder %s25, 1
        %s649 = scalar_select %p648, %s25, 1
        %p650 = scmp.lt.s32.totalorder %s26, 0
        %s651 = scalar_select %p650, %s26, 0
        %s652 = sadd.s32 %s651, %s649
        %s653 = smul.addr %s652, 8
        %s654 = scalar_lea.vmem %s6, %s653
      $region60: #{_lambda_.3} parent=55 // pred_fallthru
        _
      // Predicated region
      $region61: #{_lambda_.3} parent=55 // pred_check
        %p655 = pneg %p223
      $region62: #{_lambda_.3} parent=55 // pred_check_branch
        %657 = sbr.rel (%p655) target = $region64
      $region63: #{_lambda_.3} parent=55 // pred_region
        %p658 = scmp.lt.s32.totalorder %s25, 1
        %s659 = scalar_select %p658, %s25, 1
        %p660 = scmp.lt.s32.totalorder %s26, 0
        %s661 = scalar_select %p660, %s26, 0
        %s662 = sadd.s32 %s661, %s659
        %s663 = scalar_lea.vmem %s7, %s662
      $region64: #{_lambda_.3} parent=55 // pred_fallthru
        _
    $region56: #{_lambda_.3} parent=5 // pred_fallthru
      _
  $region6: #{_lambda_.3} parent=0 // loop_footer
    %s18 = sadd.s32 1, %s14
  $region7: #{_lambda_.3} parent=0 // loop_footer_branch
    %13 = sbr.rel target = $region3
  $region8: #{_lambda_.3} parent=0 // loop_exit
    _

// kernel: _lambda_.2
$region0: #{_lambda_.2}
  #allocation0 [shape = 'u32[]', space=smem, size = 0x4, offset = 0x4, fixed_abs, tag = 'smem constant byte address 0x4 - core index']
  #allocation1 [shape = 'u32[144,128]{1,0:T(1,128)}', space=vmem, size = 0x12000, scoped, tag = 'internal scratch']
  %s0 = inlined_call_operand.vmem [shape: f32[2,256], index: 0, kind: input, shape index: {}]
  %s1 = inlined_call_operand.hbm [shape: f32[256,256], index: 1, kind: input, shape index: {}]
  %s2 = inlined_call_operand.vmem [shape: f32[1,256], index: 2, kind: input, shape index: {}]
  %s3 = inlined_call_operand.vmem [shape: f32[256,128], index: 3, kind: input, shape index: {}]
  %s4 = inlined_call_operand.vmem [shape: f32[1,128], index: 4, kind: input, shape index: {}]
  %s5 = inlined_call_operand.vmem [shape: f32[128,64], index: 5, kind: input, shape index: {}]
  %s6 = inlined_call_operand.vmem [shape: f32[1,64], index: 6, kind: input, shape index: {}]
  %s7 = inlined_call_operand.vmem [shape: f32[64,32], index: 7, kind: input, shape index: {}]
  %s8 = inlined_call_operand.vmem [shape: f32[1,32], index: 8, kind: input, shape index: {}]
  %s9 = inlined_call_operand.vmem [shape: f32[32,32], index: 9, kind: input, shape index: {}]
  %s10 = inlined_call_operand.vmem [shape: f32[1,32], index: 10, kind: input, shape index: {}]
  %s11 = inlined_call_operand.hbm [shape: f32[32,32], index: 11, kind: input, shape index: {}]
  %s12 = inlined_call_operand.vmem [shape: f32[1,32], index: 12, kind: input, shape index: {}]
  %s13 = inlined_call_operand.hbm [shape: f32[2,32], index: 13, kind: output, shape index: {0}]
  %s14 = inlined_call_operand.vmem [shape: f32[2,32], index: 14, kind: output, shape index: {1}]
  %15 = xla_tuple %s13, %s14
  %s16 = sld [smem:[#allocation0]]
  $region78: #{_lambda_.2} parent=0
    _
  %s18 = ssub.s32 1, %s16
  %s19 = scalar_select 0, %s18, %s16
  $region1: #{_lambda_.2} parent=0
    #allocation2 [shape = 'u8[262144]{0}', space=vmem, size = 0x40000, scoped, tag = 'input window, operand 1, single buffered']
    #allocation3 [shape = 's32[1]{0}', space=sflag, size = 0x4, scoped, tag = 'scoped memory for _lambda_.2']
    #allocation4 [shape = 's32[1]{0}', space=sflag, size = 0x4, scoped, tag = 'scoped memory for _lambda_.2']
    #allocation5 [shape = 'u8[16384]{0}', space=vmem, size = 0x4000, scoped, tag = 'input window, operand 11, single buffered']
    #allocation6 [shape = 's32[1]{0}', space=sflag, size = 0x4, scoped, tag = 'scoped memory for _lambda_.2']
    #allocation7 [shape = 'u8[1024]{0}', space=vmem, size = 0x400, scoped, tag = 'output window, operand 0, single buffered']
    %20 = vsyncpa [#allocation3], 0
    %21 = vsyncpa [#allocation6], 0
    %22 = vsyncpa [#allocation4], 0
    // Predicated region
    $region2: #{_lambda_.2} parent=1 // pred_check
      _
    $region3: #{_lambda_.2} parent=1 // pred_check_branch
      %24 = sbr.rel (0) target = $region5
    $region4: #{_lambda_.2} parent=1 // pred_region
      _
    $region5: #{_lambda_.2} parent=1 // pred_fallthru
      _
    // Predicated region
    $region6: #{_lambda_.2} parent=1 // pred_check
      _
    $region7: #{_lambda_.2} parent=1 // pred_check_branch
      %26 = sbr.rel (0) target = $region9
    $region8: #{_lambda_.2} parent=1 // pred_region
      %s28 = ssub.s32 8192, 8192
      %29 = vsyncadd [#allocation3], %s28
      %s30 = sshll.u32 [#allocation2], 4
      %s31 = int_to_ptr.vmem [resolvable:$true] %s30
      %36 = dma.hbm_to_vmem [thread:$0]  %s1, 8192, %s31, [#allocation3], 256, 256, 16
    $region9: #{_lambda_.2} parent=1 // pred_fallthru
      _
    // Predicated region
    $region10: #{_lambda_.2} parent=1 // pred_check
      _
    $region11: #{_lambda_.2} parent=1 // pred_check_branch
      %38 = sbr.rel (0) target = $region13
    $region12: #{_lambda_.2} parent=1 // pred_region
      _
    $region13: #{_lambda_.2} parent=1 // pred_fallthru
      _
    // Predicated region
    $region14: #{_lambda_.2} parent=1 // pred_check
      _
    $region15: #{_lambda_.2} parent=1 // pred_check_branch
      %40 = sbr.rel (0) target = $region17
    $region16: #{_lambda_.2} parent=1 // pred_region
      _
    $region17: #{_lambda_.2} parent=1 // pred_fallthru
      _
    // Predicated region
    $region18: #{_lambda_.2} parent=1 // pred_check
      _
    $region19: #{_lambda_.2} parent=1 // pred_check_branch
      %42 = sbr.rel (0) target = $region21
    $region20: #{_lambda_.2} parent=1 // pred_region
      _
    $region21: #{_lambda_.2} parent=1 // pred_fallthru
      _
    // Predicated region
    $region22: #{_lambda_.2} parent=1 // pred_check
      _
    $region23: #{_lambda_.2} parent=1 // pred_check_branch
      %44 = sbr.rel (0) target = $region25
    $region24: #{_lambda_.2} parent=1 // pred_region
      _
    $region25: #{_lambda_.2} parent=1 // pred_fallthru
      _
    // Predicated region
    $region26: #{_lambda_.2} parent=1 // pred_check
      _
    $region27: #{_lambda_.2} parent=1 // pred_check_branch
      %46 = sbr.rel (0) target = $region29
    $region28: #{_lambda_.2} parent=1 // pred_region
      _
    $region29: #{_lambda_.2} parent=1 // pred_fallthru
      _
    // Predicated region
    $region30: #{_lambda_.2} parent=1 // pred_check
      _
    $region31: #{_lambda_.2} parent=1 // pred_check_branch
      %48 = sbr.rel (0) target = $region33
    $region32: #{_lambda_.2} parent=1 // pred_region
      _
    $region33: #{_lambda_.2} parent=1 // pred_fallthru
      _
    // Predicated region
    $region34: #{_lambda_.2} parent=1 // pred_check
      _
    $region35: #{_lambda_.2} parent=1 // pred_check_branch
      %50 = sbr.rel (0) target = $region37
    $region36: #{_lambda_.2} parent=1 // pred_region
      _
    $region37: #{_lambda_.2} parent=1 // pred_fallthru
      _
    // Predicated region
    $region38: #{_lambda_.2} parent=1 // pred_check
      _
    $region39: #{_lambda_.2} parent=1 // pred_check_branch
      %52 = sbr.rel (0) target = $region41
    $region40: #{_lambda_.2} parent=1 // pred_region
      _
    $region41: #{_lambda_.2} parent=1 // pred_fallthru
      _
    // Predicated region
    $region42: #{_lambda_.2} parent=1 // pred_check
      _
    $region43: #{_lambda_.2} parent=1 // pred_check_branch
      %54 = sbr.rel (0) target = $region45
    $region44: #{_lambda_.2} parent=1 // pred_region
      _
    $region45: #{_lambda_.2} parent=1 // pred_fallthru
      _
    // Predicated region
    $region46: #{_lambda_.2} parent=1 // pred_check
      _
    $region47: #{_lambda_.2} parent=1 // pred_check_branch
      %56 = sbr.rel (0) target = $region49
    $region48: #{_lambda_.2} parent=1 // pred_region
      %s58 = ssub.s32 512, 512
      %59 = vsyncadd [#allocation6], %s58
      %s60 = sshll.u32 [#allocation5], 4
      %s61 = int_to_ptr.vmem [resolvable:$true] %s60
      %66 = dma.hbm_to_vmem [thread:$0]  %s11, 512, %s61, [#allocation6], 128, 128, 8
    $region49: #{_lambda_.2} parent=1 // pred_fallthru
      _
    // Predicated region
    $region50: #{_lambda_.2} parent=1 // pred_check
      _
    $region51: #{_lambda_.2} parent=1 // pred_check_branch
      %68 = sbr.rel (0) target = $region53
    $region52: #{_lambda_.2} parent=1 // pred_region
      _
    $region53: #{_lambda_.2} parent=1 // pred_fallthru
      _
    // Predicated region
    $region54: #{_lambda_.2} parent=1 // pred_check
      _
    $region55: #{_lambda_.2} parent=1 // pred_check_branch
      %70 = sbr.rel (0) target = $region57
    $region56: #{_lambda_.2} parent=1 // pred_region
      %71 = dma.done [#allocation3], 8192
    $region57: #{_lambda_.2} parent=1 // pred_fallthru
      _
    // Predicated region
    $region58: #{_lambda_.2} parent=1 // pred_check
      _
    $region59: #{_lambda_.2} parent=1 // pred_check_branch
      %73 = sbr.rel (0) target = $region61
    $region60: #{_lambda_.2} parent=1 // pred_region
      %74 = dma.done [#allocation6], 512
    $region61: #{_lambda_.2} parent=1 // pred_fallthru
      _
    %v75 = vld [vmem:[%s0] sm:$0xf]
    %v76 = vld [vmem:[#allocation2] sm:$0xff]
    %v77 = vld [vmem:[#allocation2 + $0x8] sm:$0xff]
    %v78 = vld [vmem:[#allocation2 + $0x10] sm:$0xff]
    %v79 = vld [vmem:[#allocation2 + $0x18] sm:$0xff]
    %v80 = vld [vmem:[#allocation2 + $0x20] sm:$0xff]
    %v81 = vld [vmem:[#allocation2 + $0x28] sm:$0xff]
    %v82 = vld [vmem:[#allocation2 + $0x30] sm:$0xff]
    %v83 = vld [vmem:[#allocation2 + $0x38] sm:$0xff]
    %v84 = vld [vmem:[#allocation2 + $0x40] sm:$0xff]
    %v85 = vld [vmem:[#allocation2 + $0x48] sm:$0xff]
    %v86 = vld [vmem:[#allocation2 + $0x50] sm:$0xff]
    %v87 = vld [vmem:[#allocation2 + $0x58] sm:$0xff]
    %v88 = vld [vmem:[#allocation2 + $0x60] sm:$0xff]
    %v89 = vld [vmem:[#allocation2 + $0x68] sm:$0xff]
    %v90 = vld [vmem:[#allocation2 + $0x70] sm:$0xff]
    %v91 = vld [vmem:[#allocation2 + $0x78] sm:$0xff]
    %v92 = vld [vmem:[#allocation2 + $0x80] sm:$0xff]
    %v93 = vld [vmem:[#allocation2 + $0x88] sm:$0xff]
    %v94 = vld [vmem:[#allocation2 + $0x90] sm:$0xff]
    %v95 = vld [vmem:[#allocation2 + $0x98] sm:$0xff]
    %v96 = vld [vmem:[#allocation2 + $0xa0] sm:$0xff]
    %v97 = vld [vmem:[#allocation2 + $0xa8] sm:$0xff]
    %v98 = vld [vmem:[#allocation2 + $0xb0] sm:$0xff]
    %v99 = vld [vmem:[#allocation2 + $0xb8] sm:$0xff]
    %v100 = vld [vmem:[#allocation2 + $0xc0] sm:$0xff]
    %v101 = vld [vmem:[#allocation2 + $0xc8] sm:$0xff]
    %v102 = vld [vmem:[#allocation2 + $0xd0] sm:$0xff]
    %v103 = vld [vmem:[#allocation2 + $0xd8] sm:$0xff]
    %v104 = vld [vmem:[#allocation2 + $0xe0] sm:$0xff]
    %v105 = vld [vmem:[#allocation2 + $0xe8] sm:$0xff]
    %v106 = vld [vmem:[#allocation2 + $0xf0] sm:$0xff]
    %v107 = vld [vmem:[#allocation2 + $0xf8] sm:$0xff]
    %v108 = vld [vmem:[#allocation2 + $0x100] sm:$0xff]
    %v109 = vld [vmem:[#allocation2 + $0x108] sm:$0xff]
    %v110 = vld [vmem:[#allocation2 + $0x110] sm:$0xff]
    %v111 = vld [vmem:[#allocation2 + $0x118] sm:$0xff]
    %v112 = vld [vmem:[#allocation2 + $0x120] sm:$0xff]
    %v113 = vld [vmem:[#allocation2 + $0x128] sm:$0xff]
    %v114 = vld [vmem:[#allocation2 + $0x130] sm:$0xff]
    %v115 = vld [vmem:[#allocation2 + $0x138] sm:$0xff]
    %v116 = vld [vmem:[#allocation2 + $0x140] sm:$0xff]
    %v117 = vld [vmem:[#allocation2 + $0x148] sm:$0xff]
    %v118 = vld [vmem:[#allocation2 + $0x150] sm:$0xff]
    %v119 = vld [vmem:[#allocation2 + $0x158] sm:$0xff]
    %v120 = vld [vmem:[#allocation2 + $0x160] sm:$0xff]
    %v121 = vld [vmem:[#allocation2 + $0x168] sm:$0xff]
    %v122 = vld [vmem:[#allocation2 + $0x170] sm:$0xff]
    %v123 = vld [vmem:[#allocation2 + $0x178] sm:$0xff]
    %v124 = vld [vmem:[#allocation2 + $0x180] sm:$0xff]
    %v125 = vld [vmem:[#allocation2 + $0x188] sm:$0xff]
    %v126 = vld [vmem:[#allocation2 + $0x190] sm:$0xff]
    %v127 = vld [vmem:[#allocation2 + $0x198] sm:$0xff]
    %v128 = vld [vmem:[#allocation2 + $0x1a0] sm:$0xff]
    %v129 = vld [vmem:[#allocation2 + $0x1a8] sm:$0xff]
    %v130 = vld [vmem:[#allocation2 + $0x1b0] sm:$0xff]
    %v131 = vld [vmem:[#allocation2 + $0x1b8] sm:$0xff]
    %v132 = vld [vmem:[#allocation2 + $0x1c0] sm:$0xff]
    %v133 = vld [vmem:[#allocation2 + $0x1c8] sm:$0xff]
    %v134 = vld [vmem:[#allocation2 + $0x1d0] sm:$0xff]
    %v135 = vld [vmem:[#allocation2 + $0x1d8] sm:$0xff]
    %v136 = vld [vmem:[#allocation2 + $0x1e0] sm:$0xff]
    %v137 = vld [vmem:[#allocation2 + $0x1e8] sm:$0xff]
    %v138 = vld [vmem:[#allocation2 + $0x1f0] sm:$0xff]
    %v139 = vld [vmem:[#allocation2 + $0x1f8] sm:$0xff]
    %v140 = vld [vmem:[%s2] sm:$0x3]
    %v142 = vlaneseq
    %v143 = vshrl.u32 %v142, 7
    %v144 = vsub.s32 0, %v143
    %v145 = vrot.slane %v140, %v144
    %v146 = vlaneseq
    %v147 = vshrl.u32 %v146, 7
    %v148 = vsub.s32 1, %v147
    %v149 = vrot.slane %v140, %v148
    %v154 = vunpack.c.l.s4 1983009808
    %v155 = vunpack.c.0.s8 %v154
    %v156 = vlaneseq
    %v157 = vshrl.u32 %v156, 7
    %v158 = vsub.s32 %v155, %v157
    %v159 = vrot.slane %v75, %v158
    %v160 = vcombine.high %v159, %v159
    %163 = vmatprep.subr.mxu0 %v77
    %164 = vmatpush1.msra.mxu0 %v76
    %165 = vmatprep.subr.mxu0 %v79
    %166 = vmatpush1.msra.mxu0 %v78
    %167 = vmatprep.subr.mxu0 %v81
    %168 = vmatpush1.msra.mxu0 %v80
    %169 = vmatprep.subr.mxu0 %v83
    %170 = vmatpush1.msra.mxu0 %v82
    %171 = vmatprep.subr.mxu0 %v85
    %172 = vmatpush1.msra.mxu0 %v84
    %173 = vmatprep.subr.mxu0 %v87
    %174 = vmatpush1.msra.mxu0 %v86
    %175 = vmatprep.subr.mxu0 %v89
    %176 = vmatpush1.msra.mxu0 %v88
    %177 = vmatprep.subr.mxu0 %v91
    %178 = vmatpush1.msra.mxu0 %v90
    %179 = vmatprep.subr.mxu0 %v93
    %180 = vmatpush1.msra.mxu0 %v92
    %181 = vmatprep.subr.mxu0 %v95
    %182 = vmatpush1.msra.mxu0 %v94
    %183 = vmatprep.subr.mxu0 %v97
    %184 = vmatpush1.msra.mxu0 %v96
    %185 = vmatprep.subr.mxu0 %v99
    %186 = vmatpush1.msra.mxu0 %v98
    %187 = vmatprep.subr.mxu0 %v101
    %188 = vmatpush1.msra.mxu0 %v100
    %189 = vmatprep.subr.mxu0 %v103
    %190 = vmatpush1.msra.mxu0 %v102
    %191 = vmatprep.subr.mxu0 %v105
    %192 = vmatpush1.msra.mxu0 %v104
    %193 = vmatprep.subr.mxu0 %v107
    %194 = vmatpush1.msra.mxu0 %v106
    %195 = vmatprep.subr.mxu0 %v109
    %196 = vmatpush1.msra.mxu0 %v108
    %197 = vmatprep.subr.mxu0 %v111
    %198 = vmatpush1.msra.mxu0 %v110
    %199 = vmatprep.subr.mxu0 %v113
    %200 = vmatpush1.msra.mxu0 %v112
    %201 = vmatprep.subr.mxu0 %v115
    %202 = vmatpush1.msra.mxu0 %v114
    %203 = vmatprep.subr.mxu0 %v117
    %204 = vmatpush1.msra.mxu0 %v116
    %205 = vmatprep.subr.mxu0 %v119
    %206 = vmatpush1.msra.mxu0 %v118
    %207 = vmatprep.subr.mxu0 %v121
    %208 = vmatpush1.msra.mxu0 %v120
    %209 = vmatprep.subr.mxu0 %v123
    %210 = vmatpush1.msra.mxu0 %v122
    %211 = vmatprep.subr.mxu0 %v125
    %212 = vmatpush1.msra.mxu0 %v124
    %213 = vmatprep.subr.mxu0 %v127
    %214 = vmatpush1.msra.mxu0 %v126
    %215 = vmatprep.subr.mxu0 %v129
    %216 = vmatpush1.msra.mxu0 %v128
    %217 = vmatprep.subr.mxu0 %v131
    %218 = vmatpush1.msra.mxu0 %v130
    %219 = vmatprep.subr.mxu0 %v133
    %220 = vmatpush1.msra.mxu0 %v132
    %221 = vmatprep.subr.mxu0 %v135
    %222 = vmatpush1.msra.mxu0 %v134
    %223 = vmatprep.subr.mxu0 %v137
    %224 = vmatpush1.msra.mxu0 %v136
    %225 = vmatprep.subr.mxu0 %v139
    %226 = vmatpush1.msra.mxu0 %v138
    %227 = vmatprep.mubr.f32.mxu0 %v160
    %228 = vmatmul.mubr.f32.gmra.mrb[0].mxu0 %v159
    %v229 = vpop.f32.mrb[0].mxu0
    %v230 = vadd.f32 %v145, %v229
    %v231 = vpop.f32.mrb[0].mxu0
    %v232 = vadd.f32 %v149, %v231
    %233 = vdwg.mxu0
    %v234 = vmul.f32 %v230, 0.02
    %v235 = vmul.f32 %v232, 0.02
    %v236 = vmax.f32 %v230, %v234
    %v237 = vmax.f32 %v232, %v235
    %v238 = vld [vmem:[%s3] sm:$0xff]
    %v239 = vld [vmem:[%s3 + $0x8] sm:$0xff]
    %v240 = vld [vmem:[%s3 + $0x10] sm:$0xff]
    %v241 = vld [vmem:[%s3 + $0x18] sm:$0xff]
    %v242 = vld [vmem:[%s3 + $0x20] sm:$0xff]
    %v243 = vld [vmem:[%s3 + $0x28] sm:$0xff]
    %v244 = vld [vmem:[%s3 + $0x30] sm:$0xff]
    %v245 = vld [vmem:[%s3 + $0x38] sm:$0xff]
    %v246 = vld [vmem:[%s3 + $0x40] sm:$0xff]
    %v247 = vld [vmem:[%s3 + $0x48] sm:$0xff]
    %v248 = vld [vmem:[%s3 + $0x50] sm:$0xff]
    %v249 = vld [vmem:[%s3 + $0x58] sm:$0xff]
    %v250 = vld [vmem:[%s3 + $0x60] sm:$0xff]
    %v251 = vld [vmem:[%s3 + $0x68] sm:$0xff]
    %v252 = vld [vmem:[%s3 + $0x70] sm:$0xff]
    %v253 = vld [vmem:[%s3 + $0x78] sm:$0xff]
    %v254 = vld [vmem:[%s3 + $0x80] sm:$0xff]
    %v255 = vld [vmem:[%s3 + $0x88] sm:$0xff]
    %v256 = vld [vmem:[%s3 + $0x90] sm:$0xff]
    %v257 = vld [vmem:[%s3 + $0x98] sm:$0xff]
    %v258 = vld [vmem:[%s3 + $0xa0] sm:$0xff]
    %v259 = vld [vmem:[%s3 + $0xa8] sm:$0xff]
    %v260 = vld [vmem:[%s3 + $0xb0] sm:$0xff]
    %v261 = vld [vmem:[%s3 + $0xb8] sm:$0xff]
    %v262 = vld [vmem:[%s3 + $0xc0] sm:$0xff]
    %v263 = vld [vmem:[%s3 + $0xc8] sm:$0xff]
    %v264 = vld [vmem:[%s3 + $0xd0] sm:$0xff]
    %v265 = vld [vmem:[%s3 + $0xd8] sm:$0xff]
    %v266 = vld [vmem:[%s3 + $0xe0] sm:$0xff]
    %v267 = vld [vmem:[%s3 + $0xe8] sm:$0xff]
    %v268 = vld [vmem:[%s3 + $0xf0] sm:$0xff]
    %v269 = vld [vmem:[%s3 + $0xf8] sm:$0xff]
    %v270 = vld [vmem:[%s4] sm:$0x1]
    %v272 = vlaneseq
    %v273 = vshrl.u32 %v272, 7
    %v274 = vsub.s32 0, %v273
    %v275 = vrot.slane %v270, %v274
    %277 = vmatprep.subr.mxu0 0.0
    %278 = vmatpush1.msra.mxu0 %v238
    %279 = vmatprep.subr.mxu0 0.0
    %280 = vmatpush1.msra.mxu0 %v239
    %281 = vmatprep.subr.mxu0 0.0
    %282 = vmatpush1.msra.mxu0 %v240
    %283 = vmatprep.subr.mxu0 0.0
    %284 = vmatpush1.msra.mxu0 %v241
    %285 = vmatprep.subr.mxu0 0.0
    %286 = vmatpush1.msra.mxu0 %v242
    %287 = vmatprep.subr.mxu0 0.0
    %288 = vmatpush1.msra.mxu0 %v243
    %289 = vmatprep.subr.mxu0 0.0
    %290 = vmatpush1.msra.mxu0 %v244
    %291 = vmatprep.subr.mxu0 0.0
    %292 = vmatpush1.msra.mxu0 %v245
    %293 = vmatprep.subr.mxu0 0.0
    %294 = vmatpush1.msra.mxu0 %v246
    %295 = vmatprep.subr.mxu0 0.0
    %296 = vmatpush1.msra.mxu0 %v247
    %297 = vmatprep.subr.mxu0 0.0
    %298 = vmatpush1.msra.mxu0 %v248
    %299 = vmatprep.subr.mxu0 0.0
    %300 = vmatpush1.msra.mxu0 %v249
    %301 = vmatprep.subr.mxu0 0.0
    %302 = vmatpush1.msra.mxu0 %v250
    %303 = vmatprep.subr.mxu0 0.0
    %304 = vmatpush1.msra.mxu0 %v251
    %305 = vmatprep.subr.mxu0 0.0
    %306 = vmatpush1.msra.mxu0 %v252
    %307 = vmatprep.subr.mxu0 0.0
    %308 = vmatpush1.msra.mxu0 %v253
    %309 = vmatprep.subr.mxu0 0.0
    %310 = vmatpush1.msra.mxu0 %v254
    %311 = vmatprep.subr.mxu0 0.0
    %312 = vmatpush1.msra.mxu0 %v255
    %313 = vmatprep.subr.mxu0 0.0
    %314 = vmatpush1.msra.mxu0 %v256
    %315 = vmatprep.subr.mxu0 0.0
    %316 = vmatpush1.msra.mxu0 %v257
    %317 = vmatprep.subr.mxu0 0.0
    %318 = vmatpush1.msra.mxu0 %v258
    %319 = vmatprep.subr.mxu0 0.0
    %320 = vmatpush1.msra.mxu0 %v259
    %321 = vmatprep.subr.mxu0 0.0
    %322 = vmatpush1.msra.mxu0 %v260
    %323 = vmatprep.subr.mxu0 0.0
    %324 = vmatpush1.msra.mxu0 %v261
    %325 = vmatprep.subr.mxu0 0.0
    %326 = vmatpush1.msra.mxu0 %v262
    %327 = vmatprep.subr.mxu0 0.0
    %328 = vmatpush1.msra.mxu0 %v263
    %329 = vmatprep.subr.mxu0 0.0
    %330 = vmatpush1.msra.mxu0 %v264
    %331 = vmatprep.subr.mxu0 0.0
    %332 = vmatpush1.msra.mxu0 %v265
    %333 = vmatprep.subr.mxu0 0.0
    %334 = vmatpush1.msra.mxu0 %v266
    %335 = vmatprep.subr.mxu0 0.0
    %336 = vmatpush1.msra.mxu0 %v267
    %337 = vmatprep.subr.mxu0 0.0
    %338 = vmatpush1.msra.mxu0 %v268
    %339 = vmatprep.subr.mxu0 0.0
    %340 = vmatpush1.msra.mxu0 %v269
    %341 = vmatprep.mubr.f32.mxu0 %v237
    %342 = vmatmul.mubr.f32.gmra.mrb[0].mxu0 %v236
    %v343 = vpop.f32.mrb[0].mxu0
    %v344 = vadd.f32 %v275, %v343
    %v345 = vpop.f32.mrb[0].mxu0
    %346 = vdwg.mxu0
    %v347 = vmul.f32 %v344, 0.02
    %v348 = vmax.f32 %v344, %v347
    %v349 = vld [vmem:[%s5] sm:$0xff]
    %v350 = vld [vmem:[%s5 + $0x8] sm:$0xff]
    %v351 = vld [vmem:[%s5 + $0x10] sm:$0xff]
    %v352 = vld [vmem:[%s5 + $0x18] sm:$0xff]
    %v353 = vld [vmem:[%s5 + $0x20] sm:$0xff]
    %v354 = vld [vmem:[%s5 + $0x28] sm:$0xff]
    %v355 = vld [vmem:[%s5 + $0x30] sm:$0xff]
    %v356 = vld [vmem:[%s5 + $0x38] sm:$0xff]
    %v357 = vld [vmem:[%s5 + $0x40] sm:$0xff]
    %v358 = vld [vmem:[%s5 + $0x48] sm:$0xff]
    %v359 = vld [vmem:[%s5 + $0x50] sm:$0xff]
    %v360 = vld [vmem:[%s5 + $0x58] sm:$0xff]
    %v361 = vld [vmem:[%s5 + $0x60] sm:$0xff]
    %v362 = vld [vmem:[%s5 + $0x68] sm:$0xff]
    %v363 = vld [vmem:[%s5 + $0x70] sm:$0xff]
    %v364 = vld [vmem:[%s5 + $0x78] sm:$0xff]
    %v365 = vld [vmem:[%s6] sm:$0x1]
    %v367 = vlaneseq
    %v368 = vshrl.u32 %v367, 7
    %v369 = vsub.s32 0, %v368
    %v370 = vrot.slane %v365, %v369
    %372 = vmatprep.subr.mxu0 0.0
    %373 = vmatpush1.msra.mxu0 %v349
    %374 = vmatprep.subr.mxu0 0.0
    %375 = vmatpush1.msra.mxu0 %v350
    %376 = vmatprep.subr.mxu0 0.0
    %377 = vmatpush1.msra.mxu0 %v351
    %378 = vmatprep.subr.mxu0 0.0
    %379 = vmatpush1.msra.mxu0 %v352
    %380 = vmatprep.subr.mxu0 0.0
    %381 = vmatpush1.msra.mxu0 %v353
    %382 = vmatprep.subr.mxu0 0.0
    %383 = vmatpush1.msra.mxu0 %v354
    %384 = vmatprep.subr.mxu0 0.0
    %385 = vmatpush1.msra.mxu0 %v355
    %386 = vmatprep.subr.mxu0 0.0
    %387 = vmatpush1.msra.mxu0 %v356
    %388 = vmatprep.subr.mxu0 0.0
    %389 = vmatpush1.msra.mxu0 %v357
    %390 = vmatprep.subr.mxu0 0.0
    %391 = vmatpush1.msra.mxu0 %v358
    %392 = vmatprep.subr.mxu0 0.0
    %393 = vmatpush1.msra.mxu0 %v359
    %394 = vmatprep.subr.mxu0 0.0
    %395 = vmatpush1.msra.mxu0 %v360
    %396 = vmatprep.subr.mxu0 0.0
    %397 = vmatpush1.msra.mxu0 %v361
    %398 = vmatprep.subr.mxu0 0.0
    %399 = vmatpush1.msra.mxu0 %v362
    %400 = vmatprep.subr.mxu0 0.0
    %401 = vmatpush1.msra.mxu0 %v363
    %402 = vmatprep.subr.mxu0 0.0
    %403 = vmatpush1.msra.mxu0 %v364
    %404 = vmatprep.subr.mxu0 0.0
    %405 = vmatpush1.msra.mxu0 0.0
    %406 = vmatprep.subr.mxu0 0.0
    %407 = vmatpush1.msra.mxu0 0.0
    %408 = vmatprep.subr.mxu0 0.0
    %409 = vmatpush1.msra.mxu0 0.0
    %410 = vmatprep.subr.mxu0 0.0
    %411 = vmatpush1.msra.mxu0 0.0
    %412 = vmatprep.subr.mxu0 0.0
    %413 = vmatpush1.msra.mxu0 0.0
    %414 = vmatprep.subr.mxu0 0.0
    %415 = vmatpush1.msra.mxu0 0.0
    %416 = vmatprep.subr.mxu0 0.0
    %417 = vmatpush1.msra.mxu0 0.0
    %418 = vmatprep.subr.mxu0 0.0
    %419 = vmatpush1.msra.mxu0 0.0
    %420 = vmatprep.subr.mxu0 0.0
    %421 = vmatpush1.msra.mxu0 0.0
    %422 = vmatprep.subr.mxu0 0.0
    %423 = vmatpush1.msra.mxu0 0.0
    %424 = vmatprep.subr.mxu0 0.0
    %425 = vmatpush1.msra.mxu0 0.0
    %426 = vmatprep.subr.mxu0 0.0
    %427 = vmatpush1.msra.mxu0 0.0
    %428 = vmatprep.subr.mxu0 0.0
    %429 = vmatpush1.msra.mxu0 0.0
    %430 = vmatprep.subr.mxu0 0.0
    %431 = vmatpush1.msra.mxu0 0.0
    %432 = vmatprep.subr.mxu0 0.0
    %433 = vmatpush1.msra.mxu0 0.0
    %434 = vmatprep.subr.mxu0 0.0
    %435 = vmatpush1.msra.mxu0 0.0
    %436 = vmatprep.mubr.f32.mxu0 0.0
    %437 = vmatmul.mubr.f32.gmra.mrb[0].mxu0 %v348
    %v438 = vpop.f32.mrb[0].mxu0
    %v439 = vadd.f32 %v370, %v438
    %v440 = vpop.f32.mrb[0].mxu0
    %441 = vdwg.mxu0
    %v442 = vmul.f32 %v439, 0.02
    %v443 = vmax.f32 %v439, %v442
    %v444 = vld [vmem:[%s7] sm:$0xff]
    %v445 = vld [vmem:[%s7 + $0x8] sm:$0xff]
    %v446 = vld [vmem:[%s7 + $0x10] sm:$0xff]
    %v447 = vld [vmem:[%s7 + $0x18] sm:$0xff]
    %v448 = vld [vmem:[%s7 + $0x20] sm:$0xff]
    %v449 = vld [vmem:[%s7 + $0x28] sm:$0xff]
    %v450 = vld [vmem:[%s7 + $0x30] sm:$0xff]
    %v451 = vld [vmem:[%s7 + $0x38] sm:$0xff]
    %v452 = vld [vmem:[%s8] sm:$0x1]
    %v454 = vlaneseq
    %v455 = vshrl.u32 %v454, 7
    %v456 = vsub.s32 0, %v455
    %v457 = vrot.slane %v452, %v456
    %vm459 = vcmask 523264
    %v461 = vsel %vm459, %v443, 0
    %463 = vmatprep.subr.mxu0 0.0
    %464 = vmatpush1.msra.mxu0 %v444
    %465 = vmatprep.subr.mxu0 0.0
    %466 = vmatpush1.msra.mxu0 %v445
    %467 = vmatprep.subr.mxu0 0.0
    %468 = vmatpush1.msra.mxu0 %v446
    %469 = vmatprep.subr.mxu0 0.0
    %470 = vmatpush1.msra.mxu0 %v447
    %471 = vmatprep.subr.mxu0 0.0
    %472 = vmatpush1.msra.mxu0 %v448
    %473 = vmatprep.subr.mxu0 0.0
    %474 = vmatpush1.msra.mxu0 %v449
    %475 = vmatprep.subr.mxu0 0.0
    %476 = vmatpush1.msra.mxu0 %v450
    %477 = vmatprep.subr.mxu0 0.0
    %478 = vmatpush1.msra.mxu0 %v451
    %479 = vmatprep.subr.mxu0 0.0
    %480 = vmatpush1.msra.mxu0 0.0
    %481 = vmatprep.subr.mxu0 0.0
    %482 = vmatpush1.msra.mxu0 0.0
    %483 = vmatprep.subr.mxu0 0.0
    %484 = vmatpush1.msra.mxu0 0.0
    %485 = vmatprep.subr.mxu0 0.0
    %486 = vmatpush1.msra.mxu0 0.0
    %487 = vmatprep.subr.mxu0 0.0
    %488 = vmatpush1.msra.mxu0 0.0
    %489 = vmatprep.subr.mxu0 0.0
    %490 = vmatpush1.msra.mxu0 0.0
    %491 = vmatprep.subr.mxu0 0.0
    %492 = vmatpush1.msra.mxu0 0.0
    %493 = vmatprep.subr.mxu0 0.0
    %494 = vmatpush1.msra.mxu0 0.0
    %495 = vmatprep.subr.mxu0 0.0
    %496 = vmatpush1.msra.mxu0 0.0
    %497 = vmatprep.subr.mxu0 0.0
    %498 = vmatpush1.msra.mxu0 0.0
    %499 = vmatprep.subr.mxu0 0.0
    %500 = vmatpush1.msra.mxu0 0.0
    %501 = vmatprep.subr.mxu0 0.0
    %502 = vmatpush1.msra.mxu0 0.0
    %503 = vmatprep.subr.mxu0 0.0
    %504 = vmatpush1.msra.mxu0 0.0
    %505 = vmatprep.subr.mxu0 0.0
    %506 = vmatpush1.msra.mxu0 0.0
    %507 = vmatprep.subr.mxu0 0.0
    %508 = vmatpush1.msra.mxu0 0.0
    %509 = vmatprep.subr.mxu0 0.0
    %510 = vmatpush1.msra.mxu0 0.0
    %511 = vmatprep.subr.mxu0 0.0
    %512 = vmatpush1.msra.mxu0 0.0
    %513 = vmatprep.subr.mxu0 0.0
    %514 = vmatpush1.msra.mxu0 0.0
    %515 = vmatprep.subr.mxu0 0.0
    %516 = vmatpush1.msra.mxu0 0.0
    %517 = vmatprep.subr.mxu0 0.0
    %518 = vmatpush1.msra.mxu0 0.0
    %519 = vmatprep.subr.mxu0 0.0
    %520 = vmatpush1.msra.mxu0 0.0
    %521 = vmatprep.subr.mxu0 0.0
    %522 = vmatpush1.msra.mxu0 0.0
    %523 = vmatprep.subr.mxu0 0.0
    %524 = vmatpush1.msra.mxu0 0.0
    %525 = vmatprep.subr.mxu0 0.0
    %526 = vmatpush1.msra.mxu0 0.0
    %527 = vmatprep.mubr.f32.mxu0 0.0
    %528 = vmatmul.mubr.f32.gmra.mrb[0].mxu0 %v461
    %v529 = vpop.f32.mrb[0].mxu0
    %v530 = vadd.f32 %v457, %v529
    %v531 = vpop.f32.mrb[0].mxu0
    %532 = vdwg.mxu0
    %v533 = vmul.f32 %v530, 0.02
    %v534 = vmax.f32 %v530, %v533
    %v535 = vld [vmem:[%s9] sm:$0xff]
    %v536 = vld [vmem:[%s9 + $0x8] sm:$0xff]
    %v537 = vld [vmem:[%s9 + $0x10] sm:$0xff]
    %v538 = vld [vmem:[%s9 + $0x18] sm:$0xff]
    %v539 = vld [vmem:[%s10] sm:$0x1]
    %v541 = vlaneseq
    %v542 = vshrl.u32 %v541, 7
    %v543 = vsub.s32 0, %v542
    %v544 = vrot.slane %v539, %v543
    %vm546 = vcmask 261120
    %v548 = vsel %vm546, %v534, 0
    %550 = vmatprep.subr.mxu0 0.0
    %551 = vmatpush1.msra.mxu0 %v535
    %552 = vmatprep.subr.mxu0 0.0
    %553 = vmatpush1.msra.mxu0 %v536
    %554 = vmatprep.subr.mxu0 0.0
    %555 = vmatpush1.msra.mxu0 %v537
    %556 = vmatprep.subr.mxu0 0.0
    %557 = vmatpush1.msra.mxu0 %v538
    %558 = vmatprep.subr.mxu0 0.0
    %559 = vmatpush1.msra.mxu0 0.0
    %560 = vmatprep.subr.mxu0 0.0
    %561 = vmatpush1.msra.mxu0 0.0
    %562 = vmatprep.subr.mxu0 0.0
    %563 = vmatpush1.msra.mxu0 0.0
    %564 = vmatprep.subr.mxu0 0.0
    %565 = vmatpush1.msra.mxu0 0.0
    %566 = vmatprep.subr.mxu0 0.0
    %567 = vmatpush1.msra.mxu0 0.0
    %568 = vmatprep.subr.mxu0 0.0
    %569 = vmatpush1.msra.mxu0 0.0
    %570 = vmatprep.subr.mxu0 0.0
    %571 = vmatpush1.msra.mxu0 0.0
    %572 = vmatprep.subr.mxu0 0.0
    %573 = vmatpush1.msra.mxu0 0.0
    %574 = vmatprep.subr.mxu0 0.0
    %575 = vmatpush1.msra.mxu0 0.0
    %576 = vmatprep.subr.mxu0 0.0
    %577 = vmatpush1.msra.mxu0 0.0
    %578 = vmatprep.subr.mxu0 0.0
    %579 = vmatpush1.msra.mxu0 0.0
    %580 = vmatprep.subr.mxu0 0.0
    %581 = vmatpush1.msra.mxu0 0.0
    %582 = vmatprep.subr.mxu0 0.0
    %583 = vmatpush1.msra.mxu0 0.0
    %584 = vmatprep.subr.mxu0 0.0
    %585 = vmatpush1.msra.mxu0 0.0
    %586 = vmatprep.subr.mxu0 0.0
    %587 = vmatpush1.msra.mxu0 0.0
    %588 = vmatprep.subr.mxu0 0.0
    %589 = vmatpush1.msra.mxu0 0.0
    %590 = vmatprep.subr.mxu0 0.0
    %591 = vmatpush1.msra.mxu0 0.0
    %592 = vmatprep.subr.mxu0 0.0
    %593 = vmatpush1.msra.mxu0 0.0
    %594 = vmatprep.subr.mxu0 0.0
    %595 = vmatpush1.msra.mxu0 0.0
    %596 = vmatprep.subr.mxu0 0.0
    %597 = vmatpush1.msra.mxu0 0.0
    %598 = vmatprep.subr.mxu0 0.0
    %599 = vmatpush1.msra.mxu0 0.0
    %600 = vmatprep.subr.mxu0 0.0
    %601 = vmatpush1.msra.mxu0 0.0
    %602 = vmatprep.subr.mxu0 0.0
    %603 = vmatpush1.msra.mxu0 0.0
    %604 = vmatprep.subr.mxu0 0.0
    %605 = vmatpush1.msra.mxu0 0.0
    %606 = vmatprep.subr.mxu0 0.0
    %607 = vmatpush1.msra.mxu0 0.0
    %608 = vmatprep.subr.mxu0 0.0
    %609 = vmatpush1.msra.mxu0 0.0
    %610 = vmatprep.subr.mxu0 0.0
    %611 = vmatpush1.msra.mxu0 0.0
    %612 = vmatprep.subr.mxu0 0.0
    %613 = vmatpush1.msra.mxu0 0.0
    %614 = vmatprep.mubr.f32.mxu0 0.0
    %615 = vmatmul.mubr.f32.gmra.mrb[0].mxu0 %v548
    %v616 = vpop.f32.mrb[0].mxu0
    %v617 = vadd.f32 %v544, %v616
    %v618 = vpop.f32.mrb[0].mxu0
    %619 = vdwg.mxu0
    %v620 = vxor.u32 %v617, 2147483648
    %v621 = vmul.f32 %v620, 1.442695
    %v622 = vpow.pop %v621
    %v623 = vadd.f32 %v622, 1.0
    %v624 = vrcp.pop %v623
    %v625 = vmul.f32 1.0, %v624
    %vm626 = vcmask 254976
    %627 = vst.msk [vmem:[#allocation7] sm:$0x3] %vm626, %v625
    %v628 = vld [vmem:[%s12] sm:$0x1]
    %v629 = vld [vmem:[#allocation5] sm:$0xff]
    %v630 = vld [vmem:[#allocation5 + $0x8] sm:$0xff]
    %v631 = vld [vmem:[#allocation5 + $0x10] sm:$0xff]
    %v632 = vld [vmem:[#allocation5 + $0x18] sm:$0xff]
    %v634 = vsel %vm546, %v625, 0
    %636 = vmatprep.subr.mxu0 0.0
    %637 = vmatpush1.msra.mxu0 %v629
    %638 = vmatprep.subr.mxu0 0.0
    %639 = vmatpush1.msra.mxu0 %v630
    %640 = vmatprep.subr.mxu0 0.0
    %641 = vmatpush1.msra.mxu0 %v631
    %642 = vmatprep.subr.mxu0 0.0
    %643 = vmatpush1.msra.mxu0 %v632
    %644 = vmatprep.subr.mxu0 0.0
    %645 = vmatpush1.msra.mxu0 0.0
    %646 = vmatprep.subr.mxu0 0.0
    %647 = vmatpush1.msra.mxu0 0.0
    %648 = vmatprep.subr.mxu0 0.0
    %649 = vmatpush1.msra.mxu0 0.0
    %650 = vmatprep.subr.mxu0 0.0
    %651 = vmatpush1.msra.mxu0 0.0
    %652 = vmatprep.subr.mxu0 0.0
    %653 = vmatpush1.msra.mxu0 0.0
    %654 = vmatprep.subr.mxu0 0.0
    %655 = vmatpush1.msra.mxu0 0.0
    %656 = vmatprep.subr.mxu0 0.0
    %657 = vmatpush1.msra.mxu0 0.0
    %658 = vmatprep.subr.mxu0 0.0
    %659 = vmatpush1.msra.mxu0 0.0
    %660 = vmatprep.subr.mxu0 0.0
    %661 = vmatpush1.msra.mxu0 0.0
    %662 = vmatprep.subr.mxu0 0.0
    %663 = vmatpush1.msra.mxu0 0.0
    %664 = vmatprep.subr.mxu0 0.0
    %665 = vmatpush1.msra.mxu0 0.0
    %666 = vmatprep.subr.mxu0 0.0
    %667 = vmatpush1.msra.mxu0 0.0
    %668 = vmatprep.subr.mxu0 0.0
    %669 = vmatpush1.msra.mxu0 0.0
    %670 = vmatprep.subr.mxu0 0.0
    %671 = vmatpush1.msra.mxu0 0.0
    %672 = vmatprep.subr.mxu0 0.0
    %673 = vmatpush1.msra.mxu0 0.0
    %674 = vmatprep.subr.mxu0 0.0
    %675 = vmatpush1.msra.mxu0 0.0
    %676 = vmatprep.subr.mxu0 0.0
    %677 = vmatpush1.msra.mxu0 0.0
    %678 = vmatprep.subr.mxu0 0.0
    %679 = vmatpush1.msra.mxu0 0.0
    %680 = vmatprep.subr.mxu0 0.0
    %681 = vmatpush1.msra.mxu0 0.0
    %682 = vmatprep.subr.mxu0 0.0
    %683 = vmatpush1.msra.mxu0 0.0
    %684 = vmatprep.subr.mxu0 0.0
    %685 = vmatpush1.msra.mxu0 0.0
    %686 = vmatprep.subr.mxu0 0.0
    %687 = vmatpush1.msra.mxu0 0.0
    %688 = vmatprep.subr.mxu0 0.0
    %689 = vmatpush1.msra.mxu0 0.0
    %690 = vmatprep.subr.mxu0 0.0
    %691 = vmatpush1.msra.mxu0 0.0
    %692 = vmatprep.subr.mxu0 0.0
    %693 = vmatpush1.msra.mxu0 0.0
    %694 = vmatprep.subr.mxu0 0.0
    %695 = vmatpush1.msra.mxu0 0.0
    %696 = vmatprep.subr.mxu0 0.0
    %697 = vmatpush1.msra.mxu0 0.0
    %698 = vmatprep.subr.mxu0 0.0
    %699 = vmatpush1.msra.mxu0 0.0
    %700 = vmatprep.mubr.f32.mxu0 0.0
    %701 = vmatmul.mubr.f32.gmra.mrb[0].mxu0 %v634
    %v702 = vpop.f32.mrb[0].mxu0
    %v703 = vadd.f32 0.0, %v702
    %v704 = vpop.f32.mrb[0].mxu0
    %705 = vdwg.mxu0
    %v707 = vlaneseq
    %v708 = vshrl.u32 %v707, 7
    %v709 = vsub.s32 0, %v708
    %v710 = vrot.slane %v628, %v709
    %v712 = vadd.f32 %v710, %v703
    %713 = vst.msk [vmem:[%s14] sm:$0x3] %vm626, %v712
    // Predicated region
    $region62: #{_lambda_.2} parent=1 // pred_check
      _
    $region63: #{_lambda_.2} parent=1 // pred_check_branch
      %715 = sbr.rel (0) target = $region65
    $region64: #{_lambda_.2} parent=1 // pred_region
      %s717 = ssub.s32 32, 32
      %718 = vsyncadd [#allocation4], %s717
      %s720 = sshll.u32 [#allocation7], 4
      %s721 = int_to_ptr.vmem [resolvable:$true] %s720
      %723 = dma.vmem_to_hbm [thread:$0]  %s721, 32, %s13, [#allocation4]
    $region65: #{_lambda_.2} parent=1 // pred_fallthru
      _
    // Predicated region
    $region66: #{_lambda_.2} parent=1 // pred_check
      _
    $region67: #{_lambda_.2} parent=1 // pred_check_branch
      %725 = sbr.rel (0) target = $region69
    $region68: #{_lambda_.2} parent=1 // pred_region
      _
    $region69: #{_lambda_.2} parent=1 // pred_fallthru
      _
    // Predicated region
    $region70: #{_lambda_.2} parent=1 // pred_check
      _
    $region71: #{_lambda_.2} parent=1 // pred_check_branch
      %727 = sbr.rel (0) target = $region73
    $region72: #{_lambda_.2} parent=1 // pred_region
      %728 = dma.done [#allocation4], 32
    $region73: #{_lambda_.2} parent=1 // pred_fallthru
      _
    // Predicated region
    $region74: #{_lambda_.2} parent=1 // pred_check
      _
    $region75: #{_lambda_.2} parent=1 // pred_check_branch
      %730 = sbr.rel (0) target = $region77
    $region76: #{_lambda_.2} parent=1 // pred_region
      _
    $region77: #{_lambda_.2} parent=1 // pred_fallthru
      _
    %731 = vsyncpa [#allocation3], 1
    %732 = vsyncpa [#allocation6], 1
    %733 = vsyncpa [#allocation4], 1

</llo_original>
